<compile_context>
chip_gen: v5e
topology: v5e:2x2
jax: 0.10.0
libtpu: 0.0.40
codegen_flags: <defaults>
</compile_context>

<pallas_src>
import functools

import numpy as np
import jax
import jax.numpy as jnp
from jax.experimental import pallas as pl
from jax.experimental.pallas import tpu as pltpu


def _self_attention_kernel(x_ref, wqkv_ref, bqkv_ref, wpbd_ref, bpbd_ref, mask_ref,
                           out_ref, *, B, T, C, H, SPB, scale):
    # x_ref    : (R, C)          R = SPB*B*T input rows, ordered (step, b, t)
    # wqkv_ref : (C, 3*H*C)      packed [q heads | k heads | v heads], column = kind*H*C + h*C + d
    # bqkv_ref : (1, 3*H*C)
    # wpbd_ref : (H*B*C, H*B*C)  block-diagonal projection weight (w_proj.T on the diagonal)
    # bpbd_ref : (1, H*B*C)      tiled projection bias
    # mask_ref : (R, R)          additive mask: 0 within a (step, b) group, -1e30 outside
    # out_ref  : (SPB*T, H*B*C)  lane-dense slab, row = step*T + t, lane = (h*B + b)*C + c
    HC = H * C

    x = x_ref[...]
    mask = mask_ref[...]

    # One fused, lane-dense QKV projection for all heads / steps / batches.
    qkv = jnp.dot(x, wqkv_ref[...], preferred_element_type=jnp.float32) + bqkv_ref[...]

    chunks = []
    for h in range(H):                                   # static unroll over heads (H = 2)
        q = qkv[:, 0 * HC + h * C: 0 * HC + (h + 1) * C]   # (R, C)
        k = qkv[:, 1 * HC + h * C: 1 * HC + (h + 1) * C]
        v = qkv[:, 2 * HC + h * C: 2 * HC + (h + 1) * C]

        # Single (R, R) gram matrix per head (contract feature dims; no explicit k.T).
        # Block-diagonal mask keeps attention inside each (step, b) group exactly.
        att = jax.lax.dot_general(q, k, (((1,), (1,)), ((), ())),
                                  preferred_element_type=jnp.float32) * scale + mask

        m = jnp.max(att, axis=-1, keepdims=True)
        e = jnp.exp(att - m)
        p = e / jnp.sum(e, axis=-1, keepdims=True)       # exact divide (tight numerics, EUP slack)

        y = jnp.dot(p, v, preferred_element_type=jnp.float32)   # (R, C), rows (step, b, t)

        # (step, b, t) rows -> slab chunks with rows (step, t) and lanes c, one chunk per b.
        y3 = y.reshape(SPB, B * T, C)
        for b in range(B):
            chunks.append(y3[:, b * T:(b + 1) * T, :].reshape(SPB * T, C))

    # Lane-dense y slab in the FINAL store layout: lane index = (h*B + b)*C + c.
    slab = jnp.concatenate(chunks, axis=-1)              # (SPB*T, H*B*C)

    # Block-diagonal projection + bias + residual: one lane-dense MXU push, output already
    # in store layout -> single unmasked store to out_ref.
    out = jnp.dot(slab, wpbd_ref[...], preferred_element_type=jnp.float32) + bpbd_ref[...] + slab
    out_ref[...] = out.astype(out_ref.dtype)


def pack_params(params, C, n_head, batch):
    """One-time (init-time) repacking of the PyTorch Linear parameters.

    PyTorch Linear(C, H*C): weight (H*C, C), bias (H*C,).  The reference's
    .view(B,T,C,H).permute(0,3,1,2) means head h / feature d uses output row d*H + h.
    We pre-transpose so the kernel computes y = x @ W + b, pack q|k|v for all heads into one
    (C, 3*H*C) matrix, and build the block-diagonal projection weight / tiled bias that act
    directly on the (.., H*B*C) output slab.
    """
    H, B = n_head, batch

    def head_w(weight):                     # (H*C, C) -> (C_in, H*C_out), col = h*C + d
        w = weight.reshape(C, H, C)         # [d, h, i] = weight[d*H + h, i]
        w = w.transpose(2, 1, 0)            # [i, h, d]
        return w.reshape(C, H * C)

    def head_b(bias):                       # (H*C,) -> (1, H*C), col = h*C + d
        return bias.reshape(C, H).T.reshape(1, H * C)

    w_qkv = jnp.concatenate([head_w(params["w_query"]),
                             head_w(params["w_key"]),
                             head_w(params["w_value"])], axis=1)     # (C, 3*H*C)
    b_qkv = jnp.concatenate([head_b(params["b_query"]),
                             head_b(params["b_key"]),
                             head_b(params["b_value"])], axis=1)     # (1, 3*H*C)

    G = H * B
    w_proj_bd = jnp.kron(jnp.eye(G, dtype=params["w_proj"].dtype),
                         params["w_proj"].T)                          # (G*C, G*C) block-diag
    b_proj_bd = jnp.tile(params["b_proj"].reshape(1, C), (1, G))      # (1, G*C)

    return {"w_qkv": w_qkv, "b_qkv": b_qkv,
            "w_proj_bd": w_proj_bd, "b_proj_bd": b_proj_bd}


def self_attention_layer_steps(x_steps, packed, n_head=2, steps_per_block=8):
    """Batched Pallas implementation of SelfAttentionLayer.forward (mask=False, eval mode).

    x_steps: (S, B, T, C) — S independent layer invocations (e.g. IODRNN timesteps).
    returns: (S, T, n_head, B, C)
    """
    S, B, T, C = x_steps.shape
    H = n_head
    G = H * B
    scale = 1.0 / float(C) ** 0.5

    spb = max(1, min(steps_per_block, S))
    while S % spb:                          # largest divisor of S not above the request
        spb -= 1
    n_blocks = S // spb
    R = spb * B * T                         # LHS rows per grid step

    # Additive block-diagonal mask (trace-time constant, VMEM-resident across grid steps).
    # Rows are ordered (step, b, t) so the attention-group index of a row is row // T.
    groups = np.arange(R) // T
    mask = jnp.asarray(np.where(groups[:, None] == groups[None, :], 0.0, -1e30),
                       dtype=x_steps.dtype)

    kernel = functools.partial(_self_attention_kernel,
                               B=B, T=T, C=C, H=H, SPB=spb, scale=scale)

    flops = n_blocks * (2 * R * C * 3 * H * C            # fused QKV
                        + 2 * H * (2 * R * R * C)        # gram + p@v (block-diag, full compute)
                        + 2 * (spb * T) * (G * C) ** 2)  # block-diag projection
    transcendentals = n_blocks * H * R * R               # exp in softmax
    bytes_accessed = 4 * (S * B * T * C + C * 3 * H * C + 3 * H * C
                          + (G * C) ** 2 + G * C + R * R + S * T * G * C)

    out = pl.pallas_call(
        kernel,
        grid=(n_blocks,),
        in_specs=[
            pl.BlockSpec((R, C), lambda i: (i, 0)),                 # x: per-grid-step block
            pl.BlockSpec((C, 3 * H * C), lambda i: (0, 0)),         # weights: constant block
            pl.BlockSpec((1, 3 * H * C), lambda i: (0, 0)),         #   -> DMA'd once,
            pl.BlockSpec((G * C, G * C), lambda i: (0, 0)),         #      VMEM-resident
            pl.BlockSpec((1, G * C), lambda i: (0, 0)),
            pl.BlockSpec((R, R), lambda i: (0, 0)),                 # mask: constant block
        ],
        out_specs=pl.BlockSpec((spb * T, G * C), lambda i: (i, 0)),
        out_shape=jax.ShapeDtypeStruct((S * T, G * C), x_steps.dtype),
        compiler_params=pltpu.CompilerParams(dimension_semantics=("parallel",)),
        cost_estimate=pl.CostEstimate(flops=flops, transcendentals=transcendentals,
                                      bytes_accessed=bytes_accessed),
    )(x_steps.reshape(S * B * T, C),        # free row-major reshape, rows (step, b, t)
      packed["w_qkv"], packed["b_qkv"], packed["w_proj_bd"], packed["b_proj_bd"], mask)

    # Slab rows are (step, t), lanes (h, b, c): this reshape is free (no HBM transpose).
    return out.reshape(S, T, H, B, C)


def self_attention_layer(x, packed, n_head=2):
    """Single-invocation (module-equivalent) entry point: x (B, T, C) -> (T, n_head, B, C)."""
    return self_attention_layer_steps(x[None], packed, n_head=n_head, steps_per_block=1)[0]


def _reference_jax(x, params, n_head=2):
    """Pure-JAX replica of the PyTorch forward (mask=False, eval mode), exact f32 matmuls."""
    B, T, C = x.shape
    H = n_head
    hp = jax.lax.Precision.HIGHEST
    q = jnp.dot(x, params["w_query"].T, precision=hp) + params["b_query"]   # (B, T, H*C)
    k = jnp.dot(x, params["w_key"].T, precision=hp) + params["b_key"]
    v = jnp.dot(x, params["w_value"].T, precision=hp) + params["b_value"]
    # view(B,T,C,H).permute(0,3,1,2) -> (B, H, T, C)
    q = q.reshape(B, T, C, H).transpose(0, 3, 1, 2)
    k = k.reshape(B, T, C, H).transpose(0, 3, 1, 2)
    v = v.reshape(B, T, C, H).transpose(0, 3, 1, 2)
    att = jnp.einsum("bhtc,bhsc->bhts", q, k, precision=hp) * (1.0 / float(C) ** 0.5)
    att = jax.nn.softmax(att, axis=-1)
    y = jnp.einsum("bhts,bhsc->bhtc", att, v, precision=hp)
    y = jnp.dot(y, params["w_proj"].T, precision=hp) + params["b_proj"] + y
    return jnp.transpose(y, (2, 1, 0, 3))


def _init_params(key, C, n_head):
    """Deterministic init matching the PyTorch Linear shapes (uniform +-1/sqrt(fan_in))."""
    keys = jax.random.split(key, 8)
    bound = 1.0 / float(C) ** 0.5

    def u(k, shape):
        return jax.random.uniform(k, shape, jnp.float32, -bound, bound)

    return {
        "w_query": u(keys[0], (n_head * C, C)), "b_query": u(keys[1], (n_head * C,)),
        "w_key":   u(keys[2], (n_head * C, C)), "b_key":   u(keys[3], (n_head * C,)),
        "w_value": u(keys[4], (n_head * C, C)), "b_value": u(keys[5], (n_head * C,)),
        "w_proj":  u(keys[6], (C, C)),          "b_proj":  u(keys[7], (C,)),
    }


if __name__ == "__main__":
    S, B, T, C = 16, 2, 8, 32      # 16 independent layer invocations, module shape (B, T, C)
    n_head = 2

    key = jax.random.PRNGKey(0)
    k_x, k_p = jax.random.split(key)
    x_steps = jax.random.normal(k_x, (S, B, T, C), dtype=jnp.float32)
    params = _init_params(k_p, C, n_head)

    # Hoisted out of the per-call path: pack weights once at "model init".
    packed = pack_params(params, C=C, n_head=n_head, batch=B)

    fwd = jax.jit(lambda xs: self_attention_layer_steps(xs, packed, n_head=n_head,
                                                        steps_per_block=8))
    out = jax.block_until_ready(fwd(x_steps))
    assert out.shape == (S, T, n_head, B, C), out.shape

    ref = jax.vmap(lambda xx: _reference_jax(xx, params, n_head=n_head))(x_steps)
    err = float(jnp.max(jnp.abs(out - ref)))
    assert err < 2e-4, err

    # Single-invocation (module drop-in) path, grid=(1,).
    out1 = jax.block_until_ready(self_attention_layer(x_steps[0], packed, n_head=n_head))
    err1 = float(jnp.max(jnp.abs(out1 - ref[0])))
    assert err1 < 2e-4, err1

    print("KERNEL_OK")
</pallas_src>

<mosaic_0001>
module attributes {stable_mosaic.version = 11 : i64} {
  func.func @_self_attention_kernel(%arg0: i32, %arg1: memref<128x32xf32, #tpu.memory_space<vmem>>, %arg2: memref<32x192xf32, #tpu.memory_space<vmem>>, %arg3: memref<1x192xf32, #tpu.memory_space<vmem>>, %arg4: memref<128x128xf32, #tpu.memory_space<vmem>>, %arg5: memref<1x128xf32, #tpu.memory_space<vmem>>, %arg6: memref<128x128xf32, #tpu.memory_space<vmem>>, %arg7: memref<64x128xf32, #tpu.memory_space<vmem>>) attributes {dimension_semantics = [#tpu.dimension_semantics<parallel>], iteration_bounds = array<i64: 2>, scalar_prefetch = 0 : i64, scratch_operands = 0 : i64, tpu.core_type = #tpu.core_type<tc>, window_params = [{transform_indices = @transform_0, window_bounds = array<i64: 128, 32>}, {pipeline_mode = #tpu.pipeline_mode<synchronous>, transform_indices = @transform_1, window_bounds = array<i64: 32, 192>}, {pipeline_mode = #tpu.pipeline_mode<synchronous>, transform_indices = @transform_2, window_bounds = array<i64: 1, 192>}, {pipeline_mode = #tpu.pipeline_mode<synchronous>, transform_indices = @transform_3, window_bounds = array<i64: 128, 128>}, {pipeline_mode = #tpu.pipeline_mode<synchronous>, transform_indices = @transform_4, window_bounds = array<i64: 1, 128>}, {pipeline_mode = #tpu.pipeline_mode<synchronous>, transform_indices = @transform_5, window_bounds = array<i64: 128, 128>}, {transform_indices = @transform_6, window_bounds = array<i64: 64, 128>}]} {
    %c0 = arith.constant 0 : index
    %c0_0 = arith.constant 0 : index
    %0 = vector.load %arg1[%c0, %c0_0] : memref<128x32xf32, #tpu.memory_space<vmem>>, vector<128x32xf32>
    %c0_1 = arith.constant 0 : index
    %c0_2 = arith.constant 0 : index
    %1 = vector.load %arg6[%c0_1, %c0_2] : memref<128x128xf32, #tpu.memory_space<vmem>>, vector<128x128xf32>
    %c0_3 = arith.constant 0 : index
    %c0_4 = arith.constant 0 : index
    %2 = vector.load %arg2[%c0_3, %c0_4] : memref<32x192xf32, #tpu.memory_space<vmem>>, vector<32x192xf32>
    %cst = arith.constant dense<0.000000e+00> : vector<128x192xf32>
    %3 = tpu.matmul %0, %2, %cst {dimension_numbers = #tpu.dot_dimension_numbers<[1], [0], [0], [1], [0, 0, 1, 1], [], []>} : vector<128x32xf32>, vector<32x192xf32>, vector<128x192xf32> -> vector<128x192xf32>
    %c0_5 = arith.constant 0 : index
    %c0_6 = arith.constant 0 : index
    %4 = vector.load %arg3[%c0_5, %c0_6] : memref<1x192xf32, #tpu.memory_space<vmem>>, vector<1x192xf32>
    %5 = vector.broadcast %4 : vector<1x192xf32> to vector<128x192xf32>
    %6 = arith.addf %3, %5 : vector<128x192xf32>
    %7 = vector.extract_strided_slice %6 {offsets = [0, 0], sizes = [128, 32], strides = [1, 1]} : vector<128x192xf32> to vector<128x32xf32>
    %8 = vector.extract_strided_slice %6 {offsets = [0, 64], sizes = [128, 32], strides = [1, 1]} : vector<128x192xf32> to vector<128x32xf32>
    %9 = vector.extract_strided_slice %6 {offsets = [0, 128], sizes = [128, 32], strides = [1, 1]} : vector<128x192xf32> to vector<128x32xf32>
    %cst_7 = arith.constant dense<0.000000e+00> : vector<128x128xf32>
    %10 = tpu.matmul %7, %8, %cst_7 {dimension_numbers = #tpu.dot_dimension_numbers<[1], [1], [0], [0], [0, 0, 1, 0], [], []>} : vector<128x32xf32>, vector<128x32xf32>, vector<128x128xf32> -> vector<128x128xf32>
    %cst_8 = arith.constant 0.176776692 : f32
    %11 = vector.broadcast %cst_8 : f32 to vector<128x128xf32>
    %12 = arith.mulf %10, %11 : vector<128x128xf32>
    %13 = arith.addf %12, %1 : vector<128x128xf32>
    %cst_9 = arith.constant dense<0xFF800000> : vector<128xf32>
    %14 = vector.multi_reduction <maximumf>, %13, %cst_9 [1] : vector<128x128xf32> to vector<128xf32>
    %15 = vector.shape_cast %14 : vector<128xf32> to vector<128x1xf32>
    %16 = vector.broadcast %15 : vector<128x1xf32> to vector<128x128xf32>
    %17 = arith.subf %13, %16 : vector<128x128xf32>
    %18 = math.exp %17 : vector<128x128xf32>
    %cst_10 = arith.constant dense<0.000000e+00> : vector<128xf32>
    %19 = vector.multi_reduction <add>, %18, %cst_10 [1] : vector<128x128xf32> to vector<128xf32>
    %20 = vector.shape_cast %19 : vector<128xf32> to vector<128x1xf32>
    %21 = vector.broadcast %20 : vector<128x1xf32> to vector<128x128xf32>
    %22 = arith.divf %18, %21 : vector<128x128xf32>
    %cst_11 = arith.constant dense<0.000000e+00> : vector<128x32xf32>
    %23 = tpu.matmul %22, %9, %cst_11 {dimension_numbers = #tpu.dot_dimension_numbers<[1], [0], [0], [1], [0, 0, 1, 1], [], []>} : vector<128x128xf32>, vector<128x32xf32>, vector<128x32xf32> -> vector<128x32xf32>
    %24 = vector.shape_cast %23 : vector<128x32xf32> to vector<8x16x32xf32>
    %25 = vector.extract_strided_slice %24 {offsets = [0, 0, 0], sizes = [8, 8, 32], strides = [1, 1, 1]} : vector<8x16x32xf32> to vector<8x8x32xf32>
    %26 = vector.shape_cast %25 : vector<8x8x32xf32> to vector<64x32xf32>
    %27 = vector.extract_strided_slice %24 {offsets = [0, 8, 0], sizes = [8, 8, 32], strides = [1, 1, 1]} : vector<8x16x32xf32> to vector<8x8x32xf32>
    %28 = vector.shape_cast %27 : vector<8x8x32xf32> to vector<64x32xf32>
    %29 = vector.extract_strided_slice %6 {offsets = [0, 32], sizes = [128, 32], strides = [1, 1]} : vector<128x192xf32> to vector<128x32xf32>
    %30 = vector.extract_strided_slice %6 {offsets = [0, 96], sizes = [128, 32], strides = [1, 1]} : vector<128x192xf32> to vector<128x32xf32>
    %31 = vector.extract_strided_slice %6 {offsets = [0, 160], sizes = [128, 32], strides = [1, 1]} : vector<128x192xf32> to vector<128x32xf32>
    %cst_12 = arith.constant dense<0.000000e+00> : vector<128x128xf32>
    %32 = tpu.matmul %29, %30, %cst_12 {dimension_numbers = #tpu.dot_dimension_numbers<[1], [1], [0], [0], [0, 0, 1, 0], [], []>} : vector<128x32xf32>, vector<128x32xf32>, vector<128x128xf32> -> vector<128x128xf32>
    %cst_13 = arith.constant 0.176776692 : f32
    %33 = vector.broadcast %cst_13 : f32 to vector<128x128xf32>
    %34 = arith.mulf %32, %33 : vector<128x128xf32>
    %35 = arith.addf %34, %1 : vector<128x128xf32>
    %cst_14 = arith.constant dense<0xFF800000> : vector<128xf32>
    %36 = vector.multi_reduction <maximumf>, %35, %cst_14 [1] : vector<128x128xf32> to vector<128xf32>
    %37 = vector.shape_cast %36 : vector<128xf32> to vector<128x1xf32>
    %38 = vector.broadcast %37 : vector<128x1xf32> to vector<128x128xf32>
    %39 = arith.subf %35, %38 : vector<128x128xf32>
    %40 = math.exp %39 : vector<128x128xf32>
    %cst_15 = arith.constant dense<0.000000e+00> : vector<128xf32>
    %41 = vector.multi_reduction <add>, %40, %cst_15 [1] : vector<128x128xf32> to vector<128xf32>
    %42 = vector.shape_cast %41 : vector<128xf32> to vector<128x1xf32>
    %43 = vector.broadcast %42 : vector<128x1xf32> to vector<128x128xf32>
    %44 = arith.divf %40, %43 : vector<128x128xf32>
    %cst_16 = arith.constant dense<0.000000e+00> : vector<128x32xf32>
    %45 = tpu.matmul %44, %31, %cst_16 {dimension_numbers = #tpu.dot_dimension_numbers<[1], [0], [0], [1], [0, 0, 1, 1], [], []>} : vector<128x128xf32>, vector<128x32xf32>, vector<128x32xf32> -> vector<128x32xf32>
    %46 = vector.shape_cast %45 : vector<128x32xf32> to vector<8x16x32xf32>
    %47 = vector.extract_strided_slice %46 {offsets = [0, 0, 0], sizes = [8, 8, 32], strides = [1, 1, 1]} : vector<8x16x32xf32> to vector<8x8x32xf32>
    %48 = vector.shape_cast %47 : vector<8x8x32xf32> to vector<64x32xf32>
    %49 = vector.extract_strided_slice %46 {offsets = [0, 8, 0], sizes = [8, 8, 32], strides = [1, 1, 1]} : vector<8x16x32xf32> to vector<8x8x32xf32>
    %50 = vector.shape_cast %49 : vector<8x8x32xf32> to vector<64x32xf32>
    %51 = tpu.concatenate %26, %28, %48, %50 in 1 : vector<64x32xf32>, vector<64x32xf32>, vector<64x32xf32>, vector<64x32xf32> -> vector<64x128xf32>
    %c0_17 = arith.constant 0 : index
    %c0_18 = arith.constant 0 : index
    %52 = vector.load %arg4[%c0_17, %c0_18] : memref<128x128xf32, #tpu.memory_space<vmem>>, vector<128x128xf32>
    %cst_19 = arith.constant dense<0.000000e+00> : vector<64x128xf32>
    %53 = tpu.matmul %51, %52, %cst_19 {dimension_numbers = #tpu.dot_dimension_numbers<[1], [0], [0], [1], [0, 0, 1, 1], [], []>} : vector<64x128xf32>, vector<128x128xf32>, vector<64x128xf32> -> vector<64x128xf32>
    %c0_20 = arith.constant 0 : index
    %c0_21 = arith.constant 0 : index
    %54 = vector.load %arg5[%c0_20, %c0_21] : memref<1x128xf32, #tpu.memory_space<vmem>>, vector<1x128xf32>
    %55 = vector.broadcast %54 : vector<1x128xf32> to vector<64x128xf32>
    %56 = arith.addf %53, %55 : vector<64x128xf32>
    %57 = arith.addf %56, %51 : vector<64x128xf32>
    %c0_22 = arith.constant 0 : index
    %c0_23 = arith.constant 0 : index
    %58 = vector.load %arg7[%c0_22, %c0_23] : memref<64x128xf32, #tpu.memory_space<vmem>>, vector<64x128xf32>
    tpu.vector_store %arg7[%c0_22, %c0_23], %57 {strides = array<i32>} : memref<64x128xf32, #tpu.memory_space<vmem>>, vector<64x128xf32>,
    return
  }
  func.func @transform_0(%arg0: i32) -> (i32, i32) {
    %c0_i32 = arith.constant 0 : i32
    %c0_i32_0 = arith.constant 0 : i32
    return %arg0, %c0_i32 : i32, i32
  }
  func.func @transform_1(%arg0: i32) -> (i32, i32) {
    %c0_i32 = arith.constant 0 : i32
    %c0_i32_0 = arith.constant 0 : i32
    %c0_i32_1 = arith.constant 0 : i32
    return %c0_i32, %c0_i32_0 : i32, i32
  }
  func.func @transform_2(%arg0: i32) -> (i32, i32) {
    %c0_i32 = arith.constant 0 : i32
    %c0_i32_0 = arith.constant 0 : i32
    %c0_i32_1 = arith.constant 0 : i32
    return %c0_i32, %c0_i32_0 : i32, i32
  }
  func.func @transform_3(%arg0: i32) -> (i32, i32) {
    %c0_i32 = arith.constant 0 : i32
    %c0_i32_0 = arith.constant 0 : i32
    %c0_i32_1 = arith.constant 0 : i32
    return %c0_i32, %c0_i32_0 : i32, i32
  }
  func.func @transform_4(%arg0: i32) -> (i32, i32) {
    %c0_i32 = arith.constant 0 : i32
    %c0_i32_0 = arith.constant 0 : i32
    %c0_i32_1 = arith.constant 0 : i32
    return %c0_i32, %c0_i32_0 : i32, i32
  }
  func.func @transform_5(%arg0: i32) -> (i32, i32) {
    %c0_i32 = arith.constant 0 : i32
    %c0_i32_0 = arith.constant 0 : i32
    %c0_i32_1 = arith.constant 0 : i32
    return %c0_i32, %c0_i32_0 : i32, i32
  }
  func.func @transform_6(%arg0: i32) -> (i32, i32) {
    %c0_i32 = arith.constant 0 : i32
    %c0_i32_0 = arith.constant 0 : i32
    return %arg0, %c0_i32 : i32, i32
  }
}

</mosaic_0001>

<llo_original>
// kernel: _lambda_.1
$region0: #{_lambda_.1}
  #allocation0 [shape = 'u32[]', space=smem, size = 0x4, offset = 0x4, fixed_abs, tag = 'smem constant byte address 0x4 - core index']
  #allocation1 [shape = 'u32[72,128]{1,0:T(1,128)}', space=vmem, size = 0x9000, scoped, tag = 'internal scratch']
  %s0 = inlined_call_operand.hbm [shape: f32[256,32], index: 0, kind: input, shape index: {}]
  %s1 = inlined_call_operand.hbm [shape: f32[32,192], index: 1, kind: input, shape index: {}]
  %s2 = inlined_call_operand.vmem [shape: f32[1,192], index: 2, kind: input, shape index: {}]
  %s3 = inlined_call_operand.hbm [shape: f32[128,128], index: 3, kind: input, shape index: {}]
  %s4 = inlined_call_operand.vmem [shape: f32[1,128], index: 4, kind: input, shape index: {}]
  %s5 = inlined_call_operand.hbm [shape: f32[128,128], index: 5, kind: input, shape index: {}]
  %s6 = inlined_call_operand.vmem [shape: f32[128,128], index: 6, kind: output, shape index: {}]
  %s7 = sld [smem:[#allocation0]]
  $region73: #{_lambda_.1} parent=0
    _
  %s9 = ssub.s32 1, %s7
  %s10 = scalar_select 0, %s9, %s7
  $region1: #{_lambda_.1} parent=0
    #allocation2 [shape = 'u8[131072]{0}', space=vmem, size = 0x20000, scoped, tag = 'input window, operand 0']
    #allocation3 [shape = 's32[2]{0}', space=sflag, size = 0x8, scoped, tag = 'scoped memory for _lambda_.1']
    #allocation4 [shape = 'u8[32768]{0}', space=vmem, size = 0x8000, scoped, tag = 'input window, operand 1, single buffered']
    #allocation5 [shape = 's32[1]{0}', space=sflag, size = 0x4, scoped, tag = 'scoped memory for _lambda_.1']
    #allocation6 [shape = 'u8[65536]{0}', space=vmem, size = 0x10000, scoped, tag = 'input window, operand 3, single buffered']
    #allocation7 [shape = 'u8[65536]{0}', space=vmem, size = 0x10000, scoped, tag = 'input window, operand 5, single buffered']
    #allocation8 [shape = 's32[1]{0}', space=sflag, size = 0x4, scoped, tag = 'scoped memory for _lambda_.1']
    %11 = vsyncpa [#allocation3], 0
    %s12 = scalar_lea.sflag [#allocation3], 1
    %13 = vsyncpa %s12, 0
    %14 = vsyncpa [#allocation5], 0
    %15 = vsyncpa [#allocation8], 0
    loop: start=0, step=1, limit=4
    $region2: #{_lambda_.1} parent=1 // loop_pre_header
      _
    $region3: #{_lambda_.1} parent=1 // loop_header
      %s17 = sphi 0, %s21
      %p18 = scmp.ge.s32.totalorder %s17, 4
      %s27 = sphi 0, %s29
      %s30 = sphi 0, %s27
      %s31 = sphi 0, %s30
      %s47 = sphi 0, %s31
      %s51 = sphi 0, %s51
      %s53 = sphi 0, %s51
      %s54 = sphi 0, %s53
      %s68 = sphi 0, %s54
      %s72 = sphi 0, %s72
      %s74 = sphi 0, %s72
      %s75 = sphi 0, %s74
      %s89 = sphi 0, %s75
      %s93 = sphi 0, %s93
      %s95 = sphi 0, %s93
      %s96 = sphi 0, %s95
      %s110 = sphi 0, %s96
      %s114 = sphi 0, %s114
      %s116 = sphi 0, %s114
      %s117 = sphi 0, %s116
      %s131 = sphi 0, %s117
      %s135 = sphi 0, %s135
      %s137 = sphi 0, %s135
      %s138 = sphi 0, %s137
      %s152 = sphi 0, %s138
      %s158 = sphi 0, %s160
      %s161 = sphi 0, %s158
      %s162 = sphi 0, %s161
      %s178 = sphi 0, %s162
    $region4: #{_lambda_.1} parent=1 // loop_header_branch
      %20 = sbr.rel (%p18) target = $region8
    $region5: #{_lambda_.1} parent=1 // loop_body
      %s22 = ssub.s32 %s17, 1
      %s23 = ssub.s32 %s17, 2
      %s24 = sadd.s32 %s17, 1
      %s25 = ssub.s32 %s17, %s24
      %p26 = scmp.eq.s32.totalorder %s25, 0
      %s28 = sadd.s32 %s27, 1
      %s29 = scalar_select %p26, %s27, %s28
      %p32 = pneg %p26
      %p33 = scmp.eq.s32.totalorder %s17, 1
      %p34 = por %p32, %p33
      %p35 = scmp.ne.s32.totalorder %s27, %s30
      %p36 = scmp.eq.s32.totalorder %s17, 0
      %p37 = por %p35, %p36
      %p38 = scmp.ne.s32.totalorder %s27, %s30
      %p39 = scmp.eq.s32.totalorder %s22, 1
      %p40 = por %p38, %p39
      %p41 = scmp.ne.s32.totalorder %s30, %s31
      %p42 = scmp.eq.s32.totalorder %s22, 0
      %p43 = por %p41, %p42
      %p44 = scmp.ne.s32.totalorder %s30, %s31
      %p45 = scmp.eq.s32.totalorder %s23, 1
      %p46 = por %p44, %p45
      %p48 = scmp.ne.s32.totalorder %s31, %s47
      %p49 = scmp.eq.s32.totalorder %s23, 0
      %p50 = por %p48, %p49
      %s52 = sadd.s32 %s51, 1
      %p55 = scmp.eq.s32.totalorder %s17, 1
      %p56 = scmp.ne.s32.totalorder %s51, %s53
      %p57 = scmp.eq.s32.totalorder %s17, 0
      %p58 = por %p56, %p57
      %p59 = scmp.ne.s32.totalorder %s51, %s53
      %p60 = scmp.eq.s32.totalorder %s22, 1
      %p61 = por %p59, %p60
      %p62 = scmp.ne.s32.totalorder %s53, %s54
      %p63 = scmp.eq.s32.totalorder %s22, 0
      %p64 = por %p62, %p63
      %p65 = scmp.ne.s32.totalorder %s53, %s54
      %p66 = scmp.eq.s32.totalorder %s23, 1
      %p67 = por %p65, %p66
      %p69 = scmp.ne.s32.totalorder %s54, %s68
      %p70 = scmp.eq.s32.totalorder %s23, 0
      %p71 = por %p69, %p70
      %s73 = sadd.s32 %s72, 1
      %p76 = scmp.eq.s32.totalorder %s17, 1
      %p77 = scmp.ne.s32.totalorder %s72, %s74
      %p78 = scmp.eq.s32.totalorder %s17, 0
      %p79 = por %p77, %p78
      %p80 = scmp.ne.s32.totalorder %s72, %s74
      %p81 = scmp.eq.s32.totalorder %s22, 1
      %p82 = por %p80, %p81
      %p83 = scmp.ne.s32.totalorder %s74, %s75
      %p84 = scmp.eq.s32.totalorder %s22, 0
      %p85 = por %p83, %p84
      %p86 = scmp.ne.s32.totalorder %s74, %s75
      %p87 = scmp.eq.s32.totalorder %s23, 1
      %p88 = por %p86, %p87
      %p90 = scmp.ne.s32.totalorder %s75, %s89
      %p91 = scmp.eq.s32.totalorder %s23, 0
      %p92 = por %p90, %p91
      %s94 = sadd.s32 %s93, 1
      %p97 = scmp.eq.s32.totalorder %s17, 1
      %p98 = scmp.ne.s32.totalorder %s93, %s95
      %p99 = scmp.eq.s32.totalorder %s17, 0
      %p100 = por %p98, %p99
      %p101 = scmp.ne.s32.totalorder %s93, %s95
      %p102 = scmp.eq.s32.totalorder %s22, 1
      %p103 = por %p101, %p102
      %p104 = scmp.ne.s32.totalorder %s95, %s96
      %p105 = scmp.eq.s32.totalorder %s22, 0
      %p106 = por %p104, %p105
      %p107 = scmp.ne.s32.totalorder %s95, %s96
      %p108 = scmp.eq.s32.totalorder %s23, 1
      %p109 = por %p107, %p108
      %p111 = scmp.ne.s32.totalorder %s96, %s110
      %p112 = scmp.eq.s32.totalorder %s23, 0
      %p113 = por %p111, %p112
      %s115 = sadd.s32 %s114, 1
      %p118 = scmp.eq.s32.totalorder %s17, 1
      %p119 = scmp.ne.s32.totalorder %s114, %s116
      %p120 = scmp.eq.s32.totalorder %s17, 0
      %p121 = por %p119, %p120
      %p122 = scmp.ne.s32.totalorder %s114, %s116
      %p123 = scmp.eq.s32.totalorder %s22, 1
      %p124 = por %p122, %p123
      %p125 = scmp.ne.s32.totalorder %s116, %s117
      %p126 = scmp.eq.s32.totalorder %s22, 0
      %p127 = por %p125, %p126
      %p128 = scmp.ne.s32.totalorder %s116, %s117
      %p129 = scmp.eq.s32.totalorder %s23, 1
      %p130 = por %p128, %p129
      %p132 = scmp.ne.s32.totalorder %s117, %s131
      %p133 = scmp.eq.s32.totalorder %s23, 0
      %p134 = por %p132, %p133
      %s136 = sadd.s32 %s135, 1
      %p139 = scmp.eq.s32.totalorder %s17, 1
      %p140 = scmp.ne.s32.totalorder %s135, %s137
      %p141 = scmp.eq.s32.totalorder %s17, 0
      %p142 = por %p140, %p141
      %p143 = scmp.ne.s32.totalorder %s135, %s137
      %p144 = scmp.eq.s32.totalorder %s22, 1
      %p145 = por %p143, %p144
      %p146 = scmp.ne.s32.totalorder %s137, %s138
      %p147 = scmp.eq.s32.totalorder %s22, 0
      %p148 = por %p146, %p147
      %p149 = scmp.ne.s32.totalorder %s137, %s138
      %p150 = scmp.eq.s32.totalorder %s23, 1
      %p151 = por %p149, %p150
      %p153 = scmp.ne.s32.totalorder %s138, %s152
      %p154 = scmp.eq.s32.totalorder %s23, 0
      %p155 = por %p153, %p154
      %s156 = ssub.s32 %s17, %s24
      %p157 = scmp.eq.s32.totalorder %s156, 0
      %s159 = sadd.s32 %s158, 1
      %s160 = scalar_select %p157, %s158, %s159
      %p163 = pneg %p157
      %p164 = scmp.eq.s32.totalorder %s17, 1
      %p165 = por %p163, %p164
      %p166 = scmp.ne.s32.totalorder %s158, %s161
      %p167 = scmp.eq.s32.totalorder %s17, 0
      %p168 = por %p166, %p167
      %p169 = scmp.ne.s32.totalorder %s158, %s161
      %p170 = scmp.eq.s32.totalorder %s22, 1
      %p171 = por %p169, %p170
      %p172 = scmp.ne.s32.totalorder %s161, %s162
      %p173 = scmp.eq.s32.totalorder %s22, 0
      %p174 = por %p172, %p173
      %p175 = scmp.ne.s32.totalorder %s161, %s162
      %p176 = scmp.eq.s32.totalorder %s23, 1
      %p177 = por %p175, %p176
      %p179 = scmp.ne.s32.totalorder %s162, %s178
      %p180 = scmp.eq.s32.totalorder %s23, 0
      %p181 = por %p179, %p180
      %p182 = scmp.le.s32.totalorder 1, %s17
      %p183 = scmp.lt.s32.totalorder %s17, 3
      %p184 = pnand %p182, %p183
      %p185 = pneg %p184
      // Predicated region
      $region9: #{_lambda_.1} parent=5 // pred_check
        _
      $region10: #{_lambda_.1} parent=5 // pred_check_branch
        %187 = sbr.rel (%p184) target = $region12
      $region11: #{_lambda_.1} parent=5 // pred_region
        %s188 = ssub.s32 %s17, 1
        // Predicated region
        $region13: #{_lambda_.1} parent=11 // pred_check
          %p189 = pneg %p64
        $region14: #{_lambda_.1} parent=11 // pred_check_branch
          %191 = sbr.rel (%p189) target = $region16
        $region15: #{_lambda_.1} parent=11 // pred_region
          %193 = vsyncadd [#allocation5], 0
          %s194 = sshll.u32 %s1, 4
          %s195 = int_to_ptr.hbm [resolvable:$true] %s194
          %s196 = sshll.u32 [#allocation4], 4
          %s197 = int_to_ptr.vmem [resolvable:$true] %s196
          %202 = dma.hbm_to_vmem [thread:$0]  %s195, 1024, %s197, [#allocation5], 256, 256, 16
        $region16: #{_lambda_.1} parent=11 // pred_fallthru
          _
        // Predicated region
        $region17: #{_lambda_.1} parent=11 // pred_check
          %p203 = pneg %p85
        $region18: #{_lambda_.1} parent=11 // pred_check_branch
          %205 = sbr.rel (%p203) target = $region20
        $region19: #{_lambda_.1} parent=11 // pred_region
          _
        $region20: #{_lambda_.1} parent=11 // pred_fallthru
          _
        // Predicated region
        $region21: #{_lambda_.1} parent=11 // pred_check
          %p206 = pneg %p106
        $region22: #{_lambda_.1} parent=11 // pred_check_branch
          %208 = sbr.rel (%p206) target = $region24
        $region23: #{_lambda_.1} parent=11 // pred_region
          %210 = vsyncadd [#allocation5], 0
          %s211 = sshll.u32 %s3, 4
          %s212 = int_to_ptr.hbm [resolvable:$true] %s211
          %s213 = sshll.u32 [#allocation6], 4
          %s214 = int_to_ptr.vmem [resolvable:$true] %s213
          %219 = dma.hbm_to_vmem [thread:$0]  %s212, 2048, %s214, [#allocation5], 128, 128, 8
        $region24: #{_lambda_.1} parent=11 // pred_fallthru
          _
        // Predicated region
        $region25: #{_lambda_.1} parent=11 // pred_check
          %p220 = pneg %p127
        $region26: #{_lambda_.1} parent=11 // pred_check_branch
          %222 = sbr.rel (%p220) target = $region28
        $region27: #{_lambda_.1} parent=11 // pred_region
          _
        $region28: #{_lambda_.1} parent=11 // pred_fallthru
          _
        // Predicated region
        $region29: #{_lambda_.1} parent=11 // pred_check
          %p223 = pneg %p148
        $region30: #{_lambda_.1} parent=11 // pred_check_branch
          %225 = sbr.rel (%p223) target = $region32
        $region31: #{_lambda_.1} parent=11 // pred_region
          %227 = vsyncadd [#allocation8], 0
          %s228 = sshll.u32 %s5, 4
          %s229 = int_to_ptr.hbm [resolvable:$true] %s228
          %s230 = sshll.u32 [#allocation7], 4
          %s231 = int_to_ptr.vmem [resolvable:$true] %s230
          %236 = dma.hbm_to_vmem [thread:$0]  %s229, 2048, %s231, [#allocation8], 128, 128, 8
        $region32: #{_lambda_.1} parent=11 // pred_fallthru
          _
      $region12: #{_lambda_.1} parent=5 // pred_fallthru
        _
      %p237 = scmp.lt.s32.totalorder %s17, 2
      // Predicated region
      $region33: #{_lambda_.1} parent=5 // pred_check
        %p238 = pneg %p237
      $region34: #{_lambda_.1} parent=5 // pred_check_branch
        %240 = sbr.rel (%p238) target = $region36
      $region35: #{_lambda_.1} parent=5 // pred_region
        // Predicated region
        $region37: #{_lambda_.1} parent=35 // pred_check
          %p241 = pneg %p37
        $region38: #{_lambda_.1} parent=35 // pred_check_branch
          %243 = sbr.rel (%p241) target = $region40
        $region39: #{_lambda_.1} parent=35 // pred_region
          %s244 = sand.u32 %s27, 1
          %s245 = scalar_lea.sflag [#allocation3], %s244
          %s246 = sand.u32 %s27, 1
          %s247 = smul.addr %s246, 128
          %s248 = scalar_lea.vmem [#allocation2], %s247
          %s249 = smul.u32 16, %s17
          %251 = vsyncadd %s245, 0
          %s252 = smul.addr %s249, 8
          %s253 = scalar_lea.hbm %s0, %s252
          %s254 = sshll.u32 %s253, 4
          %s255 = int_to_ptr.hbm [resolvable:$true] %s254
          %s256 = sshll.u32 %s248, 4
          %s257 = int_to_ptr.vmem [resolvable:$true] %s256
          %262 = dma.hbm_to_vmem [thread:$0]  %s255, 2048, %s257, %s245, 128, 128, 8
        $region40: #{_lambda_.1} parent=35 // pred_fallthru
          _
      $region36: #{_lambda_.1} parent=5 // pred_fallthru
        _
      %p263 = scmp.le.s32.totalorder 1, %s17
      %p264 = scmp.lt.s32.totalorder %s17, 3
      %p265 = pnand %p263, %p264
      %p266 = pneg %p265
      // Predicated region
      $region41: #{_lambda_.1} parent=5 // pred_check
        _
      $region42: #{_lambda_.1} parent=5 // pred_check_branch
        %268 = sbr.rel (%p265) target = $region44
      $region43: #{_lambda_.1} parent=5 // pred_region
        %s269 = ssub.s32 %s17, 1
        %s270 = sand.u32 %s30, 1
        %s271 = scalar_lea.sflag [#allocation3], %s270
        %s272 = sand.u32 %s30, 1
        %s273 = smul.addr %s272, 128
        %s274 = scalar_lea.vmem [#allocation2], %s273
        // Predicated region
        $region45: #{_lambda_.1} parent=43 // pred_check
          %p275 = pneg %p43
        $region46: #{_lambda_.1} parent=43 // pred_check_branch
          %277 = sbr.rel (%p275) target = $region48
        $region47: #{_lambda_.1} parent=43 // pred_region
          %279 = dma.done %s271, 2048
        $region48: #{_lambda_.1} parent=43 // pred_fallthru
          _
        // Predicated region
        $region49: #{_lambda_.1} parent=43 // pred_check
          %p280 = pneg %p64
        $region50: #{_lambda_.1} parent=43 // pred_check_branch
          %282 = sbr.rel (%p280) target = $region52
        $region51: #{_lambda_.1} parent=43 // pred_region
          %284 = dma.done [#allocation5], 1024
        $region52: #{_lambda_.1} parent=43 // pred_fallthru
          _
        // Predicated region
        $region53: #{_lambda_.1} parent=43 // pred_check
          %p285 = pneg %p106
        $region54: #{_lambda_.1} parent=43 // pred_check_branch
          %287 = sbr.rel (%p285) target = $region56
        $region55: #{_lambda_.1} parent=43 // pred_region
          %289 = dma.done [#allocation5], 2048
        $region56: #{_lambda_.1} parent=43 // pred_fallthru
          _
        // Predicated region
        $region57: #{_lambda_.1} parent=43 // pred_check
          %p290 = pneg %p148
        $region58: #{_lambda_.1} parent=43 // pred_check_branch
          %292 = sbr.rel (%p290) target = $region60
        $region59: #{_lambda_.1} parent=43 // pred_region
          %294 = dma.done [#allocation8], 2048
        $region60: #{_lambda_.1} parent=43 // pred_fallthru
          _
        %s295 = sand.u32 %s30, 1
        %s296 = scalar_lea.sflag [#allocation3], %s295
        %s297 = sand.u32 %s30, 1
        %s298 = smul.addr %s297, 128
        %s299 = scalar_lea.vmem [#allocation2], %s298
        %p300 = pneg %p43
        %p301 = pneg %p40
        %p302 = pneg %p64
        %p303 = pneg %p61
        %p304 = pneg %p85
        %p305 = pneg %p82
        %p306 = pneg %p106
        %p307 = pneg %p103
        %p308 = pneg %p127
        %p309 = pneg %p124
        %p310 = pneg %p148
        %p311 = pneg %p145
        %p312 = pneg %p174
        %p313 = pneg %p171
        %s314 = smul.u32 8, %s22
        %p315 = scmp.lt.s32.totalorder %s314, 15
        %s316 = scalar_select %p315, %s314, 15
        %s317 = smul.addr %s316, 8
        %s318 = scalar_lea.vmem %s6, %s317
        %s319 = smul.u32 16, %s22
        %s320 = smul.u32 8, %s22
        %p321 = scmp.lt.s32.totalorder %s320, 15
        %s322 = scalar_select %p321, %s320, 15
        %s323 = smul.addr %s322, 8
        %s324 = scalar_lea.vmem %s6, %s323
        %s325 = smul.u32 8, %s22
        %v326 = vld [vmem:[%s274] sm:$0xff]
        %v327 = vld [vmem:[%s274 + $0x8] sm:$0xff]
        %v328 = vld [vmem:[%s274 + $0x10] sm:$0xff]
        %v329 = vld [vmem:[%s274 + $0x18] sm:$0xff]
        %v330 = vld [vmem:[%s274 + $0x20] sm:$0xff]
        %v331 = vld [vmem:[%s274 + $0x28] sm:$0xff]
        %v332 = vld [vmem:[%s274 + $0x30] sm:$0xff]
        %v333 = vld [vmem:[%s274 + $0x38] sm:$0xff]
        %v334 = vld [vmem:[%s274 + $0x40] sm:$0xff]
        %v335 = vld [vmem:[%s274 + $0x48] sm:$0xff]
        %v336 = vld [vmem:[%s274 + $0x50] sm:$0xff]
        %v337 = vld [vmem:[%s274 + $0x58] sm:$0xff]
        %v338 = vld [vmem:[%s274 + $0x60] sm:$0xff]
        %v339 = vld [vmem:[%s274 + $0x68] sm:$0xff]
        %v340 = vld [vmem:[%s274 + $0x70] sm:$0xff]
        %v341 = vld [vmem:[%s274 + $0x78] sm:$0xff]
        %v342 = vld [vmem:[#allocation7] sm:$0xff]
        %v343 = vld [vmem:[#allocation7 + $0x8] sm:$0xff]
        %v344 = vld [vmem:[#allocation7 + $0x10] sm:$0xff]
        %v345 = vld [vmem:[#allocation7 + $0x18] sm:$0xff]
        %v346 = vld [vmem:[#allocation7 + $0x20] sm:$0xff]
        %v347 = vld [vmem:[#allocation7 + $0x28] sm:$0xff]
        %v348 = vld [vmem:[#allocation7 + $0x30] sm:$0xff]
        %v349 = vld [vmem:[#allocation7 + $0x38] sm:$0xff]
        %v350 = vld [vmem:[#allocation7 + $0x40] sm:$0xff]
        %v351 = vld [vmem:[#allocation7 + $0x48] sm:$0xff]
        %v352 = vld [vmem:[#allocation7 + $0x50] sm:$0xff]
        %v353 = vld [vmem:[#allocation7 + $0x58] sm:$0xff]
        %v354 = vld [vmem:[#allocation7 + $0x60] sm:$0xff]
        %v355 = vld [vmem:[#allocation7 + $0x68] sm:$0xff]
        %v356 = vld [vmem:[#allocation7 + $0x70] sm:$0xff]
        %v357 = vld [vmem:[#allocation7 + $0x78] sm:$0xff]
        %v358 = vld [vmem:[#allocation4] sm:$0xff]
        %v359 = vld [vmem:[#allocation4 + $0x8] sm:$0xff]
        %v360 = vld [vmem:[#allocation4 + $0x10] sm:$0xff]
        %v361 = vld [vmem:[#allocation4 + $0x18] sm:$0xff]
        %v362 = vld [vmem:[#allocation4 + $0x20] sm:$0xff]
        %v363 = vld [vmem:[#allocation4 + $0x28] sm:$0xff]
        %v364 = vld [vmem:[#allocation4 + $0x30] sm:$0xff]
        %v365 = vld [vmem:[#allocation4 + $0x38] sm:$0xff]
        %v366 = vld [vmem:[%s2] sm:$0x3]
        %v368 = vperm.slane %v366, 0
        %v369 = vperm.slane %v366, 1
        %vm372 = vcmask 261120
        %v374 = vsel %vm372, %v326, 0
        %v377 = vsel %vm372, %v327, 0
        %v380 = vsel %vm372, %v328, 0
        %v383 = vsel %vm372, %v329, 0
        %v386 = vsel %vm372, %v330, 0
        %v389 = vsel %vm372, %v331, 0
        %v392 = vsel %vm372, %v332, 0
        %v395 = vsel %vm372, %v333, 0
        %v398 = vsel %vm372, %v334, 0
        %v401 = vsel %vm372, %v335, 0
        %v404 = vsel %vm372, %v336, 0
        %v407 = vsel %vm372, %v337, 0
        %v410 = vsel %vm372, %v338, 0
        %v413 = vsel %vm372, %v339, 0
        %v416 = vsel %vm372, %v340, 0
        %v419 = vsel %vm372, %v341, 0
        %421 = vmatpush.msra.mxu0 0.0
        %422 = vmatpush.msra.mxu0 0.0
        %423 = vmatpush.msra.mxu0 0.0
        %424 = vmatpush.msra.mxu0 0.0
        %425 = vmatpush.msra.mxu0 0.0
        %426 = vmatpush.msra.mxu0 0.0
        %427 = vmatpush.msra.mxu0 0.0
        %428 = vmatpush.msra.mxu0 0.0
        %429 = vmatpush.msra.mxu0 0.0
        %430 = vmatpush.msra.mxu0 0.0
        %431 = vmatpush.msra.mxu0 0.0
        %432 = vmatpush.msra.mxu0 0.0
        %433 = vmatpush.msra.mxu0 %v364
        %434 = vmatpush.msra.mxu0 %v362
        %435 = vmatpush.msra.mxu0 %v360
        %436 = vmatpush.msra.mxu0 %v358
        %437 = vmatmul.f32.gmra.mxu0 %v374
        %v438 = vpop.f32.mrf.mxu0
        %v439 = vadd.f32 %v368, %v438
        %440 = vmatmul.f32.gmra.mxu0 %v377
        %v441 = vpop.f32.mrf.mxu0
        %v442 = vadd.f32 %v368, %v441
        %443 = vmatmul.f32.gmra.mxu0 %v380
        %v444 = vpop.f32.mrf.mxu0
        %v445 = vadd.f32 %v368, %v444
        %446 = vmatmul.f32.gmra.mxu0 %v383
        %v447 = vpop.f32.mrf.mxu0
        %v448 = vadd.f32 %v368, %v447
        %449 = vmatmul.f32.gmra.mxu0 %v386
        %v450 = vpop.f32.mrf.mxu0
        %v451 = vadd.f32 %v368, %v450
        %452 = vmatmul.f32.gmra.mxu0 %v389
        %v453 = vpop.f32.mrf.mxu0
        %v454 = vadd.f32 %v368, %v453
        %455 = vmatmul.f32.gmra.mxu0 %v392
        %v456 = vpop.f32.mrf.mxu0
        %v457 = vadd.f32 %v368, %v456
        %458 = vmatmul.f32.gmra.mxu0 %v395
        %v459 = vpop.f32.mrf.mxu0
        %v460 = vadd.f32 %v368, %v459
        %461 = vmatmul.f32.gmra.mxu0 %v398
        %v462 = vpop.f32.mrf.mxu0
        %v463 = vadd.f32 %v368, %v462
        %464 = vmatmul.f32.gmra.mxu0 %v401
        %v465 = vpop.f32.mrf.mxu0
        %v466 = vadd.f32 %v368, %v465
        %467 = vmatmul.f32.gmra.mxu0 %v404
        %v468 = vpop.f32.mrf.mxu0
        %v469 = vadd.f32 %v368, %v468
        %470 = vmatmul.f32.gmra.mxu0 %v407
        %v471 = vpop.f32.mrf.mxu0
        %v472 = vadd.f32 %v368, %v471
        %473 = vmatmul.f32.gmra.mxu0 %v410
        %v474 = vpop.f32.mrf.mxu0
        %v475 = vadd.f32 %v368, %v474
        %476 = vmatmul.f32.gmra.mxu0 %v413
        %v477 = vpop.f32.mrf.mxu0
        %v478 = vadd.f32 %v368, %v477
        %479 = vmatmul.f32.gmra.mxu0 %v416
        %v480 = vpop.f32.mrf.mxu0
        %v481 = vadd.f32 %v368, %v480
        %482 = vmatmul.f32.gmra.mxu0 %v419
        %v483 = vpop.f32.mrf.mxu0
        %v484 = vadd.f32 %v368, %v483
        %485 = vdwg.mxu0
        %486 = vmatpush.msra.mxu0 0.0
        %487 = vmatpush.msra.mxu0 0.0
        %488 = vmatpush.msra.mxu0 0.0
        %489 = vmatpush.msra.mxu0 0.0
        %490 = vmatpush.msra.mxu0 0.0
        %491 = vmatpush.msra.mxu0 0.0
        %492 = vmatpush.msra.mxu0 0.0
        %493 = vmatpush.msra.mxu0 0.0
        %494 = vmatpush.msra.mxu0 0.0
        %495 = vmatpush.msra.mxu0 0.0
        %496 = vmatpush.msra.mxu0 0.0
        %497 = vmatpush.msra.mxu0 0.0
        %498 = vmatpush.msra.mxu0 %v365
        %499 = vmatpush.msra.mxu0 %v363
        %500 = vmatpush.msra.mxu0 %v361
        %501 = vmatpush.msra.mxu0 %v359
        %502 = vmatmul.f32.gmra.mxu0 %v374
        %v503 = vpop.f32.mrf.mxu0
        %v504 = vadd.f32 %v369, %v503
        %505 = vmatmul.f32.gmra.mxu0 %v377
        %v506 = vpop.f32.mrf.mxu0
        %v507 = vadd.f32 %v369, %v506
        %508 = vmatmul.f32.gmra.mxu0 %v380
        %v509 = vpop.f32.mrf.mxu0
        %v510 = vadd.f32 %v369, %v509
        %511 = vmatmul.f32.gmra.mxu0 %v383
        %v512 = vpop.f32.mrf.mxu0
        %v513 = vadd.f32 %v369, %v512
        %514 = vmatmul.f32.gmra.mxu0 %v386
        %v515 = vpop.f32.mrf.mxu0
        %v516 = vadd.f32 %v369, %v515
        %517 = vmatmul.f32.gmra.mxu0 %v389
        %v518 = vpop.f32.mrf.mxu0
        %v519 = vadd.f32 %v369, %v518
        %520 = vmatmul.f32.gmra.mxu0 %v392
        %v521 = vpop.f32.mrf.mxu0
        %v522 = vadd.f32 %v369, %v521
        %523 = vmatmul.f32.gmra.mxu0 %v395
        %v524 = vpop.f32.mrf.mxu0
        %v525 = vadd.f32 %v369, %v524
        %526 = vmatmul.f32.gmra.mxu0 %v398
        %v527 = vpop.f32.mrf.mxu0
        %v528 = vadd.f32 %v369, %v527
        %529 = vmatmul.f32.gmra.mxu0 %v401
        %v530 = vpop.f32.mrf.mxu0
        %v531 = vadd.f32 %v369, %v530
        %532 = vmatmul.f32.gmra.mxu0 %v404
        %v533 = vpop.f32.mrf.mxu0
        %v534 = vadd.f32 %v369, %v533
        %535 = vmatmul.f32.gmra.mxu0 %v407
        %v536 = vpop.f32.mrf.mxu0
        %v537 = vadd.f32 %v369, %v536
        %538 = vmatmul.f32.gmra.mxu0 %v410
        %v539 = vpop.f32.mrf.mxu0
        %v540 = vadd.f32 %v369, %v539
        %541 = vmatmul.f32.gmra.mxu0 %v413
        %v542 = vpop.f32.mrf.mxu0
        %v543 = vadd.f32 %v369, %v542
        %544 = vmatmul.f32.gmra.mxu0 %v416
        %v545 = vpop.f32.mrf.mxu0
        %v546 = vadd.f32 %v369, %v545
        %547 = vmatmul.f32.gmra.mxu0 %v419
        %v548 = vpop.f32.mrf.mxu0
        %v549 = vadd.f32 %v369, %v548
        %550 = vdwg.mxu0
        %567 = vrot.lane.b32.xlu0 %v439, 64
        %v568 = vpop.permute.xlu0 %567
        %569 = vrot.lane.b32.xlu0 %v442, 64
        %v570 = vpop.permute.xlu0 %569
        %571 = vrot.lane.b32.xlu0 %v445, 64
        %v572 = vpop.permute.xlu0 %571
        %573 = vrot.lane.b32.xlu0 %v448, 64
        %v574 = vpop.permute.xlu0 %573
        %575 = vrot.lane.b32.xlu0 %v451, 64
        %v576 = vpop.permute.xlu0 %575
        %577 = vrot.lane.b32.xlu0 %v454, 64
        %v578 = vpop.permute.xlu0 %577
        %579 = vrot.lane.b32.xlu0 %v457, 64
        %v580 = vpop.permute.xlu0 %579
        %581 = vrot.lane.b32.xlu0 %v460, 64
        %v582 = vpop.permute.xlu0 %581
        %583 = vrot.lane.b32.xlu0 %v463, 64
        %v584 = vpop.permute.xlu0 %583
        %585 = vrot.lane.b32.xlu0 %v466, 64
        %v586 = vpop.permute.xlu0 %585
        %587 = vrot.lane.b32.xlu0 %v469, 64
        %v588 = vpop.permute.xlu0 %587
        %589 = vrot.lane.b32.xlu0 %v472, 64
        %v590 = vpop.permute.xlu0 %589
        %591 = vrot.lane.b32.xlu0 %v475, 64
        %v592 = vpop.permute.xlu0 %591
        %593 = vrot.lane.b32.xlu0 %v478, 64
        %v594 = vpop.permute.xlu0 %593
        %595 = vrot.lane.b32.xlu0 %v481, 64
        %v596 = vpop.permute.xlu0 %595
        %597 = vrot.lane.b32.xlu0 %v484, 64
        %v598 = vpop.permute.xlu0 %597
        %v599 = vsel %vm372, %v439, 0
        %v601 = vsel %vm372, %v442, 0
        %v603 = vsel %vm372, %v445, 0
        %v605 = vsel %vm372, %v448, 0
        %v607 = vsel %vm372, %v451, 0
        %v609 = vsel %vm372, %v454, 0
        %v611 = vsel %vm372, %v457, 0
        %v613 = vsel %vm372, %v460, 0
        %v615 = vsel %vm372, %v463, 0
        %v617 = vsel %vm372, %v466, 0
        %v619 = vsel %vm372, %v469, 0
        %v621 = vsel %vm372, %v472, 0
        %v623 = vsel %vm372, %v475, 0
        %v625 = vsel %vm372, %v478, 0
        %v627 = vsel %vm372, %v481, 0
        %v629 = vsel %vm372, %v484, 0
        %v631 = vsel %vm372, %v568, 0
        %v633 = vsel %vm372, %v570, 0
        %v635 = vsel %vm372, %v572, 0
        %v637 = vsel %vm372, %v574, 0
        %v639 = vsel %vm372, %v576, 0
        %v641 = vsel %vm372, %v578, 0
        %v643 = vsel %vm372, %v580, 0
        %v645 = vsel %vm372, %v582, 0
        %v647 = vsel %vm372, %v584, 0
        %v649 = vsel %vm372, %v586, 0
        %v651 = vsel %vm372, %v588, 0
        %v653 = vsel %vm372, %v590, 0
        %v655 = vsel %vm372, %v592, 0
        %v657 = vsel %vm372, %v594, 0
        %v659 = vsel %vm372, %v596, 0
        %v661 = vsel %vm372, %v598, 0
        %663 = vmatpush.xpose.msra.mxu0 %v661
        %664 = vmatpush.xpose.msra.mxu0 %v659
        %665 = vmatpush.xpose.msra.mxu0 %v657
        %666 = vmatpush.xpose.msra.mxu0 %v655
        %667 = vmatpush.xpose.msra.mxu0 %v653
        %668 = vmatpush.xpose.msra.mxu0 %v651
        %669 = vmatpush.xpose.msra.mxu0 %v649
        %670 = vmatpush.xpose.msra.mxu0 %v647
        %671 = vmatpush.xpose.msra.mxu0 %v645
        %672 = vmatpush.xpose.msra.mxu0 %v643
        %673 = vmatpush.xpose.msra.mxu0 %v641
        %674 = vmatpush.xpose.msra.mxu0 %v639
        %675 = vmatpush.xpose.msra.mxu0 %v637
        %676 = vmatpush.xpose.msra.mxu0 %v635
        %677 = vmatpush.xpose.msra.mxu0 %v633
        %678 = vmatpush.xpose.msra.mxu0 %v631
        %679 = vmatmul.f32.gmra.mxu0 %v599
        %v680 = vpop.f32.mrf.mxu0
        %v681 = vadd.f32 0.0, %v680
        %682 = vmatmul.f32.gmra.mxu0 %v601
        %v683 = vpop.f32.mrf.mxu0
        %v684 = vadd.f32 0.0, %v683
        %685 = vmatmul.f32.gmra.mxu0 %v603
        %v686 = vpop.f32.mrf.mxu0
        %v687 = vadd.f32 0.0, %v686
        %688 = vmatmul.f32.gmra.mxu0 %v605
        %v689 = vpop.f32.mrf.mxu0
        %v690 = vadd.f32 0.0, %v689
        %691 = vmatmul.f32.gmra.mxu0 %v607
        %v692 = vpop.f32.mrf.mxu0
        %v693 = vadd.f32 0.0, %v692
        %694 = vmatmul.f32.gmra.mxu0 %v609
        %v695 = vpop.f32.mrf.mxu0
        %v696 = vadd.f32 0.0, %v695
        %697 = vmatmul.f32.gmra.mxu0 %v611
        %v698 = vpop.f32.mrf.mxu0
        %v699 = vadd.f32 0.0, %v698
        %700 = vmatmul.f32.gmra.mxu0 %v613
        %v701 = vpop.f32.mrf.mxu0
        %v702 = vadd.f32 0.0, %v701
        %703 = vmatmul.f32.gmra.mxu0 %v615
        %v704 = vpop.f32.mrf.mxu0
        %v705 = vadd.f32 0.0, %v704
        %706 = vmatmul.f32.gmra.mxu0 %v617
        %v707 = vpop.f32.mrf.mxu0
        %v708 = vadd.f32 0.0, %v707
        %709 = vmatmul.f32.gmra.mxu0 %v619
        %v710 = vpop.f32.mrf.mxu0
        %v711 = vadd.f32 0.0, %v710
        %712 = vmatmul.f32.gmra.mxu0 %v621
        %v713 = vpop.f32.mrf.mxu0
        %v714 = vadd.f32 0.0, %v713
        %715 = vmatmul.f32.gmra.mxu0 %v623
        %v716 = vpop.f32.mrf.mxu0
        %v717 = vadd.f32 0.0, %v716
        %718 = vmatmul.f32.gmra.mxu0 %v625
        %v719 = vpop.f32.mrf.mxu0
        %v720 = vadd.f32 0.0, %v719
        %721 = vmatmul.f32.gmra.mxu0 %v627
        %v722 = vpop.f32.mrf.mxu0
        %v723 = vadd.f32 0.0, %v722
        %724 = vmatmul.f32.gmra.mxu0 %v629
        %v725 = vpop.f32.mrf.mxu0
        %v726 = vadd.f32 0.0, %v725
        %727 = vdwg.mxu0
        %v728 = vmul.f32 %v681, 0.17677669
        %v729 = vmul.f32 %v684, 0.17677669
        %v730 = vmul.f32 %v687, 0.17677669
        %v731 = vmul.f32 %v690, 0.17677669
        %v732 = vmul.f32 %v693, 0.17677669
        %v733 = vmul.f32 %v696, 0.17677669
        %v734 = vmul.f32 %v699, 0.17677669
        %v735 = vmul.f32 %v702, 0.17677669
        %v736 = vmul.f32 %v705, 0.17677669
        %v737 = vmul.f32 %v708, 0.17677669
        %v738 = vmul.f32 %v711, 0.17677669
        %v739 = vmul.f32 %v714, 0.17677669
        %v740 = vmul.f32 %v717, 0.17677669
        %v741 = vmul.f32 %v720, 0.17677669
        %v742 = vmul.f32 %v723, 0.17677669
        %v743 = vmul.f32 %v726, 0.17677669
        %v744 = vadd.f32 %v728, %v342
        %v745 = vadd.f32 %v729, %v343
        %v746 = vadd.f32 %v730, %v344
        %v747 = vadd.f32 %v731, %v345
        %v748 = vadd.f32 %v732, %v346
        %v749 = vadd.f32 %v733, %v347
        %v750 = vadd.f32 %v734, %v348
        %v751 = vadd.f32 %v735, %v349
        %v752 = vadd.f32 %v736, %v350
        %v753 = vadd.f32 %v737, %v351
        %v754 = vadd.f32 %v738, %v352
        %v755 = vadd.f32 %v739, %v353
        %v756 = vadd.f32 %v740, %v354
        %v757 = vadd.f32 %v741, %v355
        %v758 = vadd.f32 %v742, %v356
        %v759 = vadd.f32 %v743, %v357
        %760 = vmax.xlane.f32.xlu0 %v744
        %v761 = vpop.xlane.xlu0 %760
        %762 = vmax.xlane.f32.xlu0 %v745
        %v763 = vpop.xlane.xlu0 %762
        %764 = vmax.xlane.f32.xlu0 %v746
        %v765 = vpop.xlane.xlu0 %764
        %766 = vmax.xlane.f32.xlu0 %v747
        %v767 = vpop.xlane.xlu0 %766
        %768 = vmax.xlane.f32.xlu0 %v748
        %v769 = vpop.xlane.xlu0 %768
        %770 = vmax.xlane.f32.xlu0 %v749
        %v771 = vpop.xlane.xlu0 %770
        %772 = vmax.xlane.f32.xlu0 %v750
        %v773 = vpop.xlane.xlu0 %772
        %774 = vmax.xlane.f32.xlu0 %v751
        %v775 = vpop.xlane.xlu0 %774
        %776 = vmax.xlane.f32.xlu0 %v752
        %v777 = vpop.xlane.xlu0 %776
        %778 = vmax.xlane.f32.xlu0 %v753
        %v779 = vpop.xlane.xlu0 %778
        %780 = vmax.xlane.f32.xlu0 %v754
        %v781 = vpop.xlane.xlu0 %780
        %782 = vmax.xlane.f32.xlu0 %v755
        %v783 = vpop.xlane.xlu0 %782
        %784 = vmax.xlane.f32.xlu0 %v756
        %v785 = vpop.xlane.xlu0 %784
        %786 = vmax.xlane.f32.xlu0 %v757
        %v787 = vpop.xlane.xlu0 %786
        %788 = vmax.xlane.f32.xlu0 %v758
        %v789 = vpop.xlane.xlu0 %788
        %790 = vmax.xlane.f32.xlu0 %v759
        %v791 = vpop.xlane.xlu0 %790
        %v792 = vsub.f32 %v744, %v761
        %v793 = vsub.f32 %v745, %v763
        %v794 = vsub.f32 %v746, %v765
        %v795 = vsub.f32 %v747, %v767
        %v796 = vsub.f32 %v748, %v769
        %v797 = vsub.f32 %v749, %v771
        %v798 = vsub.f32 %v750, %v773
        %v799 = vsub.f32 %v751, %v775
        %v800 = vsub.f32 %v752, %v777
        %v801 = vsub.f32 %v753, %v779
        %v802 = vsub.f32 %v754, %v781
        %v803 = vsub.f32 %v755, %v783
        %v804 = vsub.f32 %v756, %v785
        %v805 = vsub.f32 %v757, %v787
        %v806 = vsub.f32 %v758, %v789
        %v807 = vsub.f32 %v759, %v791
        %v808 = vmul.f32 %v792, 1.442695
        %v809 = vpow.pop %v808
        %v810 = vmul.f32 %v793, 1.442695
        %v811 = vpow.pop %v810
        %v812 = vmul.f32 %v794, 1.442695
        %v813 = vpow.pop %v812
        %v814 = vmul.f32 %v795, 1.442695
        %v815 = vpow.pop %v814
        %v816 = vmul.f32 %v796, 1.442695
        %v817 = vpow.pop %v816
        %v818 = vmul.f32 %v797, 1.442695
        %v819 = vpow.pop %v818
        %v820 = vmul.f32 %v798, 1.442695
        %v821 = vpow.pop %v820
        %v822 = vmul.f32 %v799, 1.442695
        %v823 = vpow.pop %v822
        %v824 = vmul.f32 %v800, 1.442695
        %v825 = vpow.pop %v824
        %v826 = vmul.f32 %v801, 1.442695
        %v827 = vpow.pop %v826
        %v828 = vmul.f32 %v802, 1.442695
        %v829 = vpow.pop %v828
        %v830 = vmul.f32 %v803, 1.442695
        %v831 = vpow.pop %v830
        %v832 = vmul.f32 %v804, 1.442695
        %v833 = vpow.pop %v832
        %v834 = vmul.f32 %v805, 1.442695
        %v835 = vpow.pop %v834
        %v836 = vmul.f32 %v806, 1.442695
        %v837 = vpow.pop %v836
        %v838 = vmul.f32 %v807, 1.442695
        %v839 = vpow.pop %v838
        %840 = vadd.xlane.f32.xlu0 %v809
        %v841 = vpop.xlane.xlu0 %840
        %842 = vadd.xlane.f32.xlu0 %v811
        %v843 = vpop.xlane.xlu0 %842
        %844 = vadd.xlane.f32.xlu0 %v813
        %v845 = vpop.xlane.xlu0 %844
        %846 = vadd.xlane.f32.xlu0 %v815
        %v847 = vpop.xlane.xlu0 %846
        %848 = vadd.xlane.f32.xlu0 %v817
        %v849 = vpop.xlane.xlu0 %848
        %850 = vadd.xlane.f32.xlu0 %v819
        %v851 = vpop.xlane.xlu0 %850
        %852 = vadd.xlane.f32.xlu0 %v821
        %v853 = vpop.xlane.xlu0 %852
        %854 = vadd.xlane.f32.xlu0 %v823
        %v855 = vpop.xlane.xlu0 %854
        %856 = vadd.xlane.f32.xlu0 %v825
        %v857 = vpop.xlane.xlu0 %856
        %858 = vadd.xlane.f32.xlu0 %v827
        %v859 = vpop.xlane.xlu0 %858
        %860 = vadd.xlane.f32.xlu0 %v829
        %v861 = vpop.xlane.xlu0 %860
        %862 = vadd.xlane.f32.xlu0 %v831
        %v863 = vpop.xlane.xlu0 %862
        %864 = vadd.xlane.f32.xlu0 %v833
        %v865 = vpop.xlane.xlu0 %864
        %866 = vadd.xlane.f32.xlu0 %v835
        %v867 = vpop.xlane.xlu0 %866
        %868 = vadd.xlane.f32.xlu0 %v837
        %v869 = vpop.xlane.xlu0 %868
        %870 = vadd.xlane.f32.xlu0 %v839
        %v871 = vpop.xlane.xlu0 %870
        %v872 = vrcp.pop %v841
        %v873 = vmul.f32 %v841, %v872
        %v874 = vsub.f32 1.0, %v873
        %v875 = vmul.f32 %v872, %v874
        %v876 = vadd.f32 %v872, %v875
        %vm877 = vweird.f32 %v841
        %vm878 = vweird.f32 %v872
        %vm879 = vmor %vm877, %vm878
        %v880 = vsel %vm879, %v872, %v876
        %v881 = vand.u32 2147483647, %v841
        %vm882 = vcmp.eq.f32.partialorder %v881, 8.507059e+37
        %v883 = vand.u32 %v841, 2147483648
        %v884 = vor.u32 1.1754944e-38, %v883
        %v885 = vsel %vm882, %v884, %v880
        %v886 = vmul.f32 %v809, %v885
        %v887 = vrcp.pop %v843
        %v888 = vmul.f32 %v843, %v887
        %v889 = vsub.f32 1.0, %v888
        %v890 = vmul.f32 %v887, %v889
        %v891 = vadd.f32 %v887, %v890
        %vm892 = vweird.f32 %v843
        %vm893 = vweird.f32 %v887
        %vm894 = vmor %vm892, %vm893
        %v895 = vsel %vm894, %v887, %v891
        %v896 = vand.u32 2147483647, %v843
        %vm897 = vcmp.eq.f32.partialorder %v896, 8.507059e+37
        %v898 = vand.u32 %v843, 2147483648
        %v899 = vor.u32 1.1754944e-38, %v898
        %v900 = vsel %vm897, %v899, %v895
        %v901 = vmul.f32 %v811, %v900
        %v902 = vrcp.pop %v845
        %v903 = vmul.f32 %v845, %v902
        %v904 = vsub.f32 1.0, %v903
        %v905 = vmul.f32 %v902, %v904
        %v906 = vadd.f32 %v902, %v905
        %vm907 = vweird.f32 %v845
        %vm908 = vweird.f32 %v902
        %vm909 = vmor %vm907, %vm908
        %v910 = vsel %vm909, %v902, %v906
        %v911 = vand.u32 2147483647, %v845
        %vm912 = vcmp.eq.f32.partialorder %v911, 8.507059e+37
        %v913 = vand.u32 %v845, 2147483648
        %v914 = vor.u32 1.1754944e-38, %v913
        %v915 = vsel %vm912, %v914, %v910
        %v916 = vmul.f32 %v813, %v915
        %v917 = vrcp.pop %v847
        %v918 = vmul.f32 %v847, %v917
        %v919 = vsub.f32 1.0, %v918
        %v920 = vmul.f32 %v917, %v919
        %v921 = vadd.f32 %v917, %v920
        %vm922 = vweird.f32 %v847
        %vm923 = vweird.f32 %v917
        %vm924 = vmor %vm922, %vm923
        %v925 = vsel %vm924, %v917, %v921
        %v926 = vand.u32 2147483647, %v847
        %vm927 = vcmp.eq.f32.partialorder %v926, 8.507059e+37
        %v928 = vand.u32 %v847, 2147483648
        %v929 = vor.u32 1.1754944e-38, %v928
        %v930 = vsel %vm927, %v929, %v925
        %v931 = vmul.f32 %v815, %v930
        %v932 = vrcp.pop %v849
        %v933 = vmul.f32 %v849, %v932
        %v934 = vsub.f32 1.0, %v933
        %v935 = vmul.f32 %v932, %v934
        %v936 = vadd.f32 %v932, %v935
        %vm937 = vweird.f32 %v849
        %vm938 = vweird.f32 %v932
        %vm939 = vmor %vm937, %vm938
        %v940 = vsel %vm939, %v932, %v936
        %v941 = vand.u32 2147483647, %v849
        %vm942 = vcmp.eq.f32.partialorder %v941, 8.507059e+37
        %v943 = vand.u32 %v849, 2147483648
        %v944 = vor.u32 1.1754944e-38, %v943
        %v945 = vsel %vm942, %v944, %v940
        %v946 = vmul.f32 %v817, %v945
        %v947 = vrcp.pop %v851
        %v948 = vmul.f32 %v851, %v947
        %v949 = vsub.f32 1.0, %v948
        %v950 = vmul.f32 %v947, %v949
        %v951 = vadd.f32 %v947, %v950
        %vm952 = vweird.f32 %v851
        %vm953 = vweird.f32 %v947
        %vm954 = vmor %vm952, %vm953
        %v955 = vsel %vm954, %v947, %v951
        %v956 = vand.u32 2147483647, %v851
        %vm957 = vcmp.eq.f32.partialorder %v956, 8.507059e+37
        %v958 = vand.u32 %v851, 2147483648
        %v959 = vor.u32 1.1754944e-38, %v958
        %v960 = vsel %vm957, %v959, %v955
        %v961 = vmul.f32 %v819, %v960
        %v962 = vrcp.pop %v853
        %v963 = vmul.f32 %v853, %v962
        %v964 = vsub.f32 1.0, %v963
        %v965 = vmul.f32 %v962, %v964
        %v966 = vadd.f32 %v962, %v965
        %vm967 = vweird.f32 %v853
        %vm968 = vweird.f32 %v962
        %vm969 = vmor %vm967, %vm968
        %v970 = vsel %vm969, %v962, %v966
        %v971 = vand.u32 2147483647, %v853
        %vm972 = vcmp.eq.f32.partialorder %v971, 8.507059e+37
        %v973 = vand.u32 %v853, 2147483648
        %v974 = vor.u32 1.1754944e-38, %v973
        %v975 = vsel %vm972, %v974, %v970
        %v976 = vmul.f32 %v821, %v975
        %v977 = vrcp.pop %v855
        %v978 = vmul.f32 %v855, %v977
        %v979 = vsub.f32 1.0, %v978
        %v980 = vmul.f32 %v977, %v979
        %v981 = vadd.f32 %v977, %v980
        %vm982 = vweird.f32 %v855
        %vm983 = vweird.f32 %v977
        %vm984 = vmor %vm982, %vm983
        %v985 = vsel %vm984, %v977, %v981
        %v986 = vand.u32 2147483647, %v855
        %vm987 = vcmp.eq.f32.partialorder %v986, 8.507059e+37
        %v988 = vand.u32 %v855, 2147483648
        %v989 = vor.u32 1.1754944e-38, %v988
        %v990 = vsel %vm987, %v989, %v985
        %v991 = vmul.f32 %v823, %v990
        %v992 = vrcp.pop %v857
        %v993 = vmul.f32 %v857, %v992
        %v994 = vsub.f32 1.0, %v993
        %v995 = vmul.f32 %v992, %v994
        %v996 = vadd.f32 %v992, %v995
        %vm997 = vweird.f32 %v857
        %vm998 = vweird.f32 %v992
        %vm999 = vmor %vm997, %vm998
        %v1000 = vsel %vm999, %v992, %v996
        %v1001 = vand.u32 2147483647, %v857
        %vm1002 = vcmp.eq.f32.partialorder %v1001, 8.507059e+37
        %v1003 = vand.u32 %v857, 2147483648
        %v1004 = vor.u32 1.1754944e-38, %v1003
        %v1005 = vsel %vm1002, %v1004, %v1000
        %v1006 = vmul.f32 %v825, %v1005
        %v1007 = vrcp.pop %v859
        %v1008 = vmul.f32 %v859, %v1007
        %v1009 = vsub.f32 1.0, %v1008
        %v1010 = vmul.f32 %v1007, %v1009
        %v1011 = vadd.f32 %v1007, %v1010
        %vm1012 = vweird.f32 %v859
        %vm1013 = vweird.f32 %v1007
        %vm1014 = vmor %vm1012, %vm1013
        %v1015 = vsel %vm1014, %v1007, %v1011
        %v1016 = vand.u32 2147483647, %v859
        %vm1017 = vcmp.eq.f32.partialorder %v1016, 8.507059e+37
        %v1018 = vand.u32 %v859, 2147483648
        %v1019 = vor.u32 1.1754944e-38, %v1018
        %v1020 = vsel %vm1017, %v1019, %v1015
        %v1021 = vmul.f32 %v827, %v1020
        %v1022 = vrcp.pop %v861
        %v1023 = vmul.f32 %v861, %v1022
        %v1024 = vsub.f32 1.0, %v1023
        %v1025 = vmul.f32 %v1022, %v1024
        %v1026 = vadd.f32 %v1022, %v1025
        %vm1027 = vweird.f32 %v861
        %vm1028 = vweird.f32 %v1022
        %vm1029 = vmor %vm1027, %vm1028
        %v1030 = vsel %vm1029, %v1022, %v1026
        %v1031 = vand.u32 2147483647, %v861
        %vm1032 = vcmp.eq.f32.partialorder %v1031, 8.507059e+37
        %v1033 = vand.u32 %v861, 2147483648
        %v1034 = vor.u32 1.1754944e-38, %v1033
        %v1035 = vsel %vm1032, %v1034, %v1030
        %v1036 = vmul.f32 %v829, %v1035
        %v1037 = vrcp.pop %v863
        %v1038 = vmul.f32 %v863, %v1037
        %v1039 = vsub.f32 1.0, %v1038
        %v1040 = vmul.f32 %v1037, %v1039
        %v1041 = vadd.f32 %v1037, %v1040
        %vm1042 = vweird.f32 %v863
        %vm1043 = vweird.f32 %v1037
        %vm1044 = vmor %vm1042, %vm1043
        %v1045 = vsel %vm1044, %v1037, %v1041
        %v1046 = vand.u32 2147483647, %v863
        %vm1047 = vcmp.eq.f32.partialorder %v1046, 8.507059e+37
        %v1048 = vand.u32 %v863, 2147483648
        %v1049 = vor.u32 1.1754944e-38, %v1048
        %v1050 = vsel %vm1047, %v1049, %v1045
        %v1051 = vmul.f32 %v831, %v1050
        %v1052 = vrcp.pop %v865
        %v1053 = vmul.f32 %v865, %v1052
        %v1054 = vsub.f32 1.0, %v1053
        %v1055 = vmul.f32 %v1052, %v1054
        %v1056 = vadd.f32 %v1052, %v1055
        %vm1057 = vweird.f32 %v865
        %vm1058 = vweird.f32 %v1052
        %vm1059 = vmor %vm1057, %vm1058
        %v1060 = vsel %vm1059, %v1052, %v1056
        %v1061 = vand.u32 2147483647, %v865
        %vm1062 = vcmp.eq.f32.partialorder %v1061, 8.507059e+37
        %v1063 = vand.u32 %v865, 2147483648
        %v1064 = vor.u32 1.1754944e-38, %v1063
        %v1065 = vsel %vm1062, %v1064, %v1060
        %v1066 = vmul.f32 %v833, %v1065
        %v1067 = vrcp.pop %v867
        %v1068 = vmul.f32 %v867, %v1067
        %v1069 = vsub.f32 1.0, %v1068
        %v1070 = vmul.f32 %v1067, %v1069
        %v1071 = vadd.f32 %v1067, %v1070
        %vm1072 = vweird.f32 %v867
        %vm1073 = vweird.f32 %v1067
        %vm1074 = vmor %vm1072, %vm1073
        %v1075 = vsel %vm1074, %v1067, %v1071
        %v1076 = vand.u32 2147483647, %v867
        %vm1077 = vcmp.eq.f32.partialorder %v1076, 8.507059e+37
        %v1078 = vand.u32 %v867, 2147483648
        %v1079 = vor.u32 1.1754944e-38, %v1078
        %v1080 = vsel %vm1077, %v1079, %v1075
        %v1081 = vmul.f32 %v835, %v1080
        %v1082 = vrcp.pop %v869
        %v1083 = vmul.f32 %v869, %v1082
        %v1084 = vsub.f32 1.0, %v1083
        %v1085 = vmul.f32 %v1082, %v1084
        %v1086 = vadd.f32 %v1082, %v1085
        %vm1087 = vweird.f32 %v869
        %vm1088 = vweird.f32 %v1082
        %vm1089 = vmor %vm1087, %vm1088
        %v1090 = vsel %vm1089, %v1082, %v1086
        %v1091 = vand.u32 2147483647, %v869
        %vm1092 = vcmp.eq.f32.partialorder %v1091, 8.507059e+37
        %v1093 = vand.u32 %v869, 2147483648
        %v1094 = vor.u32 1.1754944e-38, %v1093
        %v1095 = vsel %vm1092, %v1094, %v1090
        %v1096 = vmul.f32 %v837, %v1095
        %v1097 = vrcp.pop %v871
        %v1098 = vmul.f32 %v871, %v1097
        %v1099 = vsub.f32 1.0, %v1098
        %v1100 = vmul.f32 %v1097, %v1099
        %v1101 = vadd.f32 %v1097, %v1100
        %vm1102 = vweird.f32 %v871
        %vm1103 = vweird.f32 %v1097
        %vm1104 = vmor %vm1102, %vm1103
        %v1105 = vsel %vm1104, %v1097, %v1101
        %v1106 = vand.u32 2147483647, %v871
        %vm1107 = vcmp.eq.f32.partialorder %v1106, 8.507059e+37
        %v1108 = vand.u32 %v871, 2147483648
        %v1109 = vor.u32 1.1754944e-38, %v1108
        %v1110 = vsel %vm1107, %v1109, %v1105
        %v1111 = vmul.f32 %v839, %v1110
        %1112 = vmatpush.msra.mxu0 %v549
        %1113 = vmatpush.msra.mxu0 %v546
        %1114 = vmatpush.msra.mxu0 %v543
        %1115 = vmatpush.msra.mxu0 %v540
        %1116 = vmatpush.msra.mxu0 %v537
        %1117 = vmatpush.msra.mxu0 %v534
        %1118 = vmatpush.msra.mxu0 %v531
        %1119 = vmatpush.msra.mxu0 %v528
        %1120 = vmatpush.msra.mxu0 %v525
        %1121 = vmatpush.msra.mxu0 %v522
        %1122 = vmatpush.msra.mxu0 %v519
        %1123 = vmatpush.msra.mxu0 %v516
        %1124 = vmatpush.msra.mxu0 %v513
        %1125 = vmatpush.msra.mxu0 %v510
        %1126 = vmatpush.msra.mxu0 %v507
        %1127 = vmatpush.msra.mxu0 %v504
        %1128 = vmatmul.f32.gmra.mxu0 %v886
        %v1129 = vpop.f32.mrf.mxu0
        %v1130 = vadd.f32 0.0, %v1129
        %1131 = vmatmul.f32.gmra.mxu0 %v901
        %v1132 = vpop.f32.mrf.mxu0
        %v1133 = vadd.f32 0.0, %v1132
        %1134 = vmatmul.f32.gmra.mxu0 %v916
        %v1135 = vpop.f32.mrf.mxu0
        %v1136 = vadd.f32 0.0, %v1135
        %1137 = vmatmul.f32.gmra.mxu0 %v931
        %v1138 = vpop.f32.mrf.mxu0
        %v1139 = vadd.f32 0.0, %v1138
        %1140 = vmatmul.f32.gmra.mxu0 %v946
        %v1141 = vpop.f32.mrf.mxu0
        %v1142 = vadd.f32 0.0, %v1141
        %1143 = vmatmul.f32.gmra.mxu0 %v961
        %v1144 = vpop.f32.mrf.mxu0
        %v1145 = vadd.f32 0.0, %v1144
        %1146 = vmatmul.f32.gmra.mxu0 %v976
        %v1147 = vpop.f32.mrf.mxu0
        %v1148 = vadd.f32 0.0, %v1147
        %1149 = vmatmul.f32.gmra.mxu0 %v991
        %v1150 = vpop.f32.mrf.mxu0
        %v1151 = vadd.f32 0.0, %v1150
        %1152 = vmatmul.f32.gmra.mxu0 %v1006
        %v1153 = vpop.f32.mrf.mxu0
        %v1154 = vadd.f32 0.0, %v1153
        %1155 = vmatmul.f32.gmra.mxu0 %v1021
        %v1156 = vpop.f32.mrf.mxu0
        %v1157 = vadd.f32 0.0, %v1156
        %1158 = vmatmul.f32.gmra.mxu0 %v1036
        %v1159 = vpop.f32.mrf.mxu0
        %v1160 = vadd.f32 0.0, %v1159
        %1161 = vmatmul.f32.gmra.mxu0 %v1051
        %v1162 = vpop.f32.mrf.mxu0
        %v1163 = vadd.f32 0.0, %v1162
        %1164 = vmatmul.f32.gmra.mxu0 %v1066
        %v1165 = vpop.f32.mrf.mxu0
        %v1166 = vadd.f32 0.0, %v1165
        %1167 = vmatmul.f32.gmra.mxu0 %v1081
        %v1168 = vpop.f32.mrf.mxu0
        %v1169 = vadd.f32 0.0, %v1168
        %1170 = vmatmul.f32.gmra.mxu0 %v1096
        %v1171 = vpop.f32.mrf.mxu0
        %v1172 = vadd.f32 0.0, %v1171
        %1173 = vmatmul.f32.gmra.mxu0 %v1111
        %v1174 = vpop.f32.mrf.mxu0
        %v1175 = vadd.f32 0.0, %v1174
        %1176 = vdwg.mxu0
        %1177 = vrot.lane.b32.xlu0 %v439, 96
        %v1178 = vpop.permute.xlu0 %1177
        %1179 = vrot.lane.b32.xlu0 %v442, 96
        %v1180 = vpop.permute.xlu0 %1179
        %1181 = vrot.lane.b32.xlu0 %v445, 96
        %v1182 = vpop.permute.xlu0 %1181
        %1183 = vrot.lane.b32.xlu0 %v448, 96
        %v1184 = vpop.permute.xlu0 %1183
        %1185 = vrot.lane.b32.xlu0 %v451, 96
        %v1186 = vpop.permute.xlu0 %1185
        %1187 = vrot.lane.b32.xlu0 %v454, 96
        %v1188 = vpop.permute.xlu0 %1187
        %1189 = vrot.lane.b32.xlu0 %v457, 96
        %v1190 = vpop.permute.xlu0 %1189
        %1191 = vrot.lane.b32.xlu0 %v460, 96
        %v1192 = vpop.permute.xlu0 %1191
        %1193 = vrot.lane.b32.xlu0 %v463, 96
        %v1194 = vpop.permute.xlu0 %1193
        %1195 = vrot.lane.b32.xlu0 %v466, 96
        %v1196 = vpop.permute.xlu0 %1195
        %1197 = vrot.lane.b32.xlu0 %v469, 96
        %v1198 = vpop.permute.xlu0 %1197
        %1199 = vrot.lane.b32.xlu0 %v472, 96
        %v1200 = vpop.permute.xlu0 %1199
        %1201 = vrot.lane.b32.xlu0 %v475, 96
        %v1202 = vpop.permute.xlu0 %1201
        %1203 = vrot.lane.b32.xlu0 %v478, 96
        %v1204 = vpop.permute.xlu0 %1203
        %1205 = vrot.lane.b32.xlu0 %v481, 96
        %v1206 = vpop.permute.xlu0 %1205
        %1207 = vrot.lane.b32.xlu0 %v484, 96
        %v1208 = vpop.permute.xlu0 %1207
        %1209 = vrot.lane.b32.xlu0 %v439, 32
        %v1210 = vpop.permute.xlu0 %1209
        %1211 = vrot.lane.b32.xlu0 %v442, 32
        %v1212 = vpop.permute.xlu0 %1211
        %1213 = vrot.lane.b32.xlu0 %v445, 32
        %v1214 = vpop.permute.xlu0 %1213
        %1215 = vrot.lane.b32.xlu0 %v448, 32
        %v1216 = vpop.permute.xlu0 %1215
        %1217 = vrot.lane.b32.xlu0 %v451, 32
        %v1218 = vpop.permute.xlu0 %1217
        %1219 = vrot.lane.b32.xlu0 %v454, 32
        %v1220 = vpop.permute.xlu0 %1219
        %1221 = vrot.lane.b32.xlu0 %v457, 32
        %v1222 = vpop.permute.xlu0 %1221
        %1223 = vrot.lane.b32.xlu0 %v460, 32
        %v1224 = vpop.permute.xlu0 %1223
        %1225 = vrot.lane.b32.xlu0 %v463, 32
        %v1226 = vpop.permute.xlu0 %1225
        %1227 = vrot.lane.b32.xlu0 %v466, 32
        %v1228 = vpop.permute.xlu0 %1227
        %1229 = vrot.lane.b32.xlu0 %v469, 32
        %v1230 = vpop.permute.xlu0 %1229
        %1231 = vrot.lane.b32.xlu0 %v472, 32
        %v1232 = vpop.permute.xlu0 %1231
        %1233 = vrot.lane.b32.xlu0 %v475, 32
        %v1234 = vpop.permute.xlu0 %1233
        %1235 = vrot.lane.b32.xlu0 %v478, 32
        %v1236 = vpop.permute.xlu0 %1235
        %1237 = vrot.lane.b32.xlu0 %v481, 32
        %v1238 = vpop.permute.xlu0 %1237
        %1239 = vrot.lane.b32.xlu0 %v484, 32
        %v1240 = vpop.permute.xlu0 %1239
        %v1241 = vsel %vm372, %v1178, 0
        %v1243 = vsel %vm372, %v1180, 0
        %v1245 = vsel %vm372, %v1182, 0
        %v1247 = vsel %vm372, %v1184, 0
        %v1249 = vsel %vm372, %v1186, 0
        %v1251 = vsel %vm372, %v1188, 0
        %v1253 = vsel %vm372, %v1190, 0
        %v1255 = vsel %vm372, %v1192, 0
        %v1257 = vsel %vm372, %v1194, 0
        %v1259 = vsel %vm372, %v1196, 0
        %v1261 = vsel %vm372, %v1198, 0
        %v1263 = vsel %vm372, %v1200, 0
        %v1265 = vsel %vm372, %v1202, 0
        %v1267 = vsel %vm372, %v1204, 0
        %v1269 = vsel %vm372, %v1206, 0
        %v1271 = vsel %vm372, %v1208, 0
        %v1273 = vsel %vm372, %v1210, 0
        %v1275 = vsel %vm372, %v1212, 0
        %v1277 = vsel %vm372, %v1214, 0
        %v1279 = vsel %vm372, %v1216, 0
        %v1281 = vsel %vm372, %v1218, 0
        %v1283 = vsel %vm372, %v1220, 0
        %v1285 = vsel %vm372, %v1222, 0
        %v1287 = vsel %vm372, %v1224, 0
        %v1289 = vsel %vm372, %v1226, 0
        %v1291 = vsel %vm372, %v1228, 0
        %v1293 = vsel %vm372, %v1230, 0
        %v1295 = vsel %vm372, %v1232, 0
        %v1297 = vsel %vm372, %v1234, 0
        %v1299 = vsel %vm372, %v1236, 0
        %v1301 = vsel %vm372, %v1238, 0
        %v1303 = vsel %vm372, %v1240, 0
        %1305 = vmatpush.xpose.msra.mxu0 %v1303
        %1306 = vmatpush.xpose.msra.mxu0 %v1301
        %1307 = vmatpush.xpose.msra.mxu0 %v1299
        %1308 = vmatpush.xpose.msra.mxu0 %v1297
        %1309 = vmatpush.xpose.msra.mxu0 %v1295
        %1310 = vmatpush.xpose.msra.mxu0 %v1293
        %1311 = vmatpush.xpose.msra.mxu0 %v1291
        %1312 = vmatpush.xpose.msra.mxu0 %v1289
        %1313 = vmatpush.xpose.msra.mxu0 %v1287
        %1314 = vmatpush.xpose.msra.mxu0 %v1285
        %1315 = vmatpush.xpose.msra.mxu0 %v1283
        %1316 = vmatpush.xpose.msra.mxu0 %v1281
        %1317 = vmatpush.xpose.msra.mxu0 %v1279
        %1318 = vmatpush.xpose.msra.mxu0 %v1277
        %1319 = vmatpush.xpose.msra.mxu0 %v1275
        %1320 = vmatpush.xpose.msra.mxu0 %v1273
        %1321 = vmatmul.f32.gmra.mxu0 %v1241
        %v1322 = vpop.f32.mrf.mxu0
        %v1323 = vadd.f32 0.0, %v1322
        %1324 = vmatmul.f32.gmra.mxu0 %v1243
        %v1325 = vpop.f32.mrf.mxu0
        %v1326 = vadd.f32 0.0, %v1325
        %1327 = vmatmul.f32.gmra.mxu0 %v1245
        %v1328 = vpop.f32.mrf.mxu0
        %v1329 = vadd.f32 0.0, %v1328
        %1330 = vmatmul.f32.gmra.mxu0 %v1247
        %v1331 = vpop.f32.mrf.mxu0
        %v1332 = vadd.f32 0.0, %v1331
        %1333 = vmatmul.f32.gmra.mxu0 %v1249
        %v1334 = vpop.f32.mrf.mxu0
        %v1335 = vadd.f32 0.0, %v1334
        %1336 = vmatmul.f32.gmra.mxu0 %v1251
        %v1337 = vpop.f32.mrf.mxu0
        %v1338 = vadd.f32 0.0, %v1337
        %1339 = vmatmul.f32.gmra.mxu0 %v1253
        %v1340 = vpop.f32.mrf.mxu0
        %v1341 = vadd.f32 0.0, %v1340
        %1342 = vmatmul.f32.gmra.mxu0 %v1255
        %v1343 = vpop.f32.mrf.mxu0
        %v1344 = vadd.f32 0.0, %v1343
        %1345 = vmatmul.f32.gmra.mxu0 %v1257
        %v1346 = vpop.f32.mrf.mxu0
        %v1347 = vadd.f32 0.0, %v1346
        %1348 = vmatmul.f32.gmra.mxu0 %v1259
        %v1349 = vpop.f32.mrf.mxu0
        %v1350 = vadd.f32 0.0, %v1349
        %1351 = vmatmul.f32.gmra.mxu0 %v1261
        %v1352 = vpop.f32.mrf.mxu0
        %v1353 = vadd.f32 0.0, %v1352
        %1354 = vmatmul.f32.gmra.mxu0 %v1263
        %v1355 = vpop.f32.mrf.mxu0
        %v1356 = vadd.f32 0.0, %v1355
        %1357 = vmatmul.f32.gmra.mxu0 %v1265
        %v1358 = vpop.f32.mrf.mxu0
        %v1359 = vadd.f32 0.0, %v1358
        %1360 = vmatmul.f32.gmra.mxu0 %v1267
        %v1361 = vpop.f32.mrf.mxu0
        %v1362 = vadd.f32 0.0, %v1361
        %1363 = vmatmul.f32.gmra.mxu0 %v1269
        %v1364 = vpop.f32.mrf.mxu0
        %v1365 = vadd.f32 0.0, %v1364
        %1366 = vmatmul.f32.gmra.mxu0 %v1271
        %v1367 = vpop.f32.mrf.mxu0
        %v1368 = vadd.f32 0.0, %v1367
        %1369 = vdwg.mxu0
        %v1370 = vmul.f32 %v1323, 0.17677669
        %v1371 = vmul.f32 %v1326, 0.17677669
        %v1372 = vmul.f32 %v1329, 0.17677669
        %v1373 = vmul.f32 %v1332, 0.17677669
        %v1374 = vmul.f32 %v1335, 0.17677669
        %v1375 = vmul.f32 %v1338, 0.17677669
        %v1376 = vmul.f32 %v1341, 0.17677669
        %v1377 = vmul.f32 %v1344, 0.17677669
        %v1378 = vmul.f32 %v1347, 0.17677669
        %v1379 = vmul.f32 %v1350, 0.17677669
        %v1380 = vmul.f32 %v1353, 0.17677669
        %v1381 = vmul.f32 %v1356, 0.17677669
        %v1382 = vmul.f32 %v1359, 0.17677669
        %v1383 = vmul.f32 %v1362, 0.17677669
        %v1384 = vmul.f32 %v1365, 0.17677669
        %v1385 = vmul.f32 %v1368, 0.17677669
        %v1386 = vadd.f32 %v1370, %v342
        %v1387 = vadd.f32 %v1371, %v343
        %v1388 = vadd.f32 %v1372, %v344
        %v1389 = vadd.f32 %v1373, %v345
        %v1390 = vadd.f32 %v1374, %v346
        %v1391 = vadd.f32 %v1375, %v347
        %v1392 = vadd.f32 %v1376, %v348
        %v1393 = vadd.f32 %v1377, %v349
        %v1394 = vadd.f32 %v1378, %v350
        %v1395 = vadd.f32 %v1379, %v351
        %v1396 = vadd.f32 %v1380, %v352
        %v1397 = vadd.f32 %v1381, %v353
        %v1398 = vadd.f32 %v1382, %v354
        %v1399 = vadd.f32 %v1383, %v355
        %v1400 = vadd.f32 %v1384, %v356
        %v1401 = vadd.f32 %v1385, %v357
        %1402 = vmax.xlane.f32.xlu0 %v1386
        %v1403 = vpop.xlane.xlu0 %1402
        %1404 = vmax.xlane.f32.xlu0 %v1387
        %v1405 = vpop.xlane.xlu0 %1404
        %1406 = vmax.xlane.f32.xlu0 %v1388
        %v1407 = vpop.xlane.xlu0 %1406
        %1408 = vmax.xlane.f32.xlu0 %v1389
        %v1409 = vpop.xlane.xlu0 %1408
        %1410 = vmax.xlane.f32.xlu0 %v1390
        %v1411 = vpop.xlane.xlu0 %1410
        %1412 = vmax.xlane.f32.xlu0 %v1391
        %v1413 = vpop.xlane.xlu0 %1412
        %1414 = vmax.xlane.f32.xlu0 %v1392
        %v1415 = vpop.xlane.xlu0 %1414
        %1416 = vmax.xlane.f32.xlu0 %v1393
        %v1417 = vpop.xlane.xlu0 %1416
        %1418 = vmax.xlane.f32.xlu0 %v1394
        %v1419 = vpop.xlane.xlu0 %1418
        %1420 = vmax.xlane.f32.xlu0 %v1395
        %v1421 = vpop.xlane.xlu0 %1420
        %1422 = vmax.xlane.f32.xlu0 %v1396
        %v1423 = vpop.xlane.xlu0 %1422
        %1424 = vmax.xlane.f32.xlu0 %v1397
        %v1425 = vpop.xlane.xlu0 %1424
        %1426 = vmax.xlane.f32.xlu0 %v1398
        %v1427 = vpop.xlane.xlu0 %1426
        %1428 = vmax.xlane.f32.xlu0 %v1399
        %v1429 = vpop.xlane.xlu0 %1428
        %1430 = vmax.xlane.f32.xlu0 %v1400
        %v1431 = vpop.xlane.xlu0 %1430
        %1432 = vmax.xlane.f32.xlu0 %v1401
        %v1433 = vpop.xlane.xlu0 %1432
        %v1434 = vsub.f32 %v1386, %v1403
        %v1435 = vsub.f32 %v1387, %v1405
        %v1436 = vsub.f32 %v1388, %v1407
        %v1437 = vsub.f32 %v1389, %v1409
        %v1438 = vsub.f32 %v1390, %v1411
        %v1439 = vsub.f32 %v1391, %v1413
        %v1440 = vsub.f32 %v1392, %v1415
        %v1441 = vsub.f32 %v1393, %v1417
        %v1442 = vsub.f32 %v1394, %v1419
        %v1443 = vsub.f32 %v1395, %v1421
        %v1444 = vsub.f32 %v1396, %v1423
        %v1445 = vsub.f32 %v1397, %v1425
        %v1446 = vsub.f32 %v1398, %v1427
        %v1447 = vsub.f32 %v1399, %v1429
        %v1448 = vsub.f32 %v1400, %v1431
        %v1449 = vsub.f32 %v1401, %v1433
        %v1450 = vmul.f32 %v1434, 1.442695
        %v1451 = vpow.pop %v1450
        %v1452 = vmul.f32 %v1435, 1.442695
        %v1453 = vpow.pop %v1452
        %v1454 = vmul.f32 %v1436, 1.442695
        %v1455 = vpow.pop %v1454
        %v1456 = vmul.f32 %v1437, 1.442695
        %v1457 = vpow.pop %v1456
        %v1458 = vmul.f32 %v1438, 1.442695
        %v1459 = vpow.pop %v1458
        %v1460 = vmul.f32 %v1439, 1.442695
        %v1461 = vpow.pop %v1460
        %v1462 = vmul.f32 %v1440, 1.442695
        %v1463 = vpow.pop %v1462
        %v1464 = vmul.f32 %v1441, 1.442695
        %v1465 = vpow.pop %v1464
        %v1466 = vmul.f32 %v1442, 1.442695
        %v1467 = vpow.pop %v1466
        %v1468 = vmul.f32 %v1443, 1.442695
        %v1469 = vpow.pop %v1468
        %v1470 = vmul.f32 %v1444, 1.442695
        %v1471 = vpow.pop %v1470
        %v1472 = vmul.f32 %v1445, 1.442695
        %v1473 = vpow.pop %v1472
        %v1474 = vmul.f32 %v1446, 1.442695
        %v1475 = vpow.pop %v1474
        %v1476 = vmul.f32 %v1447, 1.442695
        %v1477 = vpow.pop %v1476
        %v1478 = vmul.f32 %v1448, 1.442695
        %v1479 = vpow.pop %v1478
        %v1480 = vmul.f32 %v1449, 1.442695
        %v1481 = vpow.pop %v1480
        %1482 = vadd.xlane.f32.xlu0 %v1451
        %v1483 = vpop.xlane.xlu0 %1482
        %1484 = vadd.xlane.f32.xlu0 %v1453
        %v1485 = vpop.xlane.xlu0 %1484
        %1486 = vadd.xlane.f32.xlu0 %v1455
        %v1487 = vpop.xlane.xlu0 %1486
        %1488 = vadd.xlane.f32.xlu0 %v1457
        %v1489 = vpop.xlane.xlu0 %1488
        %1490 = vadd.xlane.f32.xlu0 %v1459
        %v1491 = vpop.xlane.xlu0 %1490
        %1492 = vadd.xlane.f32.xlu0 %v1461
        %v1493 = vpop.xlane.xlu0 %1492
        %1494 = vadd.xlane.f32.xlu0 %v1463
        %v1495 = vpop.xlane.xlu0 %1494
        %1496 = vadd.xlane.f32.xlu0 %v1465
        %v1497 = vpop.xlane.xlu0 %1496
        %1498 = vadd.xlane.f32.xlu0 %v1467
        %v1499 = vpop.xlane.xlu0 %1498
        %1500 = vadd.xlane.f32.xlu0 %v1469
        %v1501 = vpop.xlane.xlu0 %1500
        %1502 = vadd.xlane.f32.xlu0 %v1471
        %v1503 = vpop.xlane.xlu0 %1502
        %1504 = vadd.xlane.f32.xlu0 %v1473
        %v1505 = vpop.xlane.xlu0 %1504
        %1506 = vadd.xlane.f32.xlu0 %v1475
        %v1507 = vpop.xlane.xlu0 %1506
        %1508 = vadd.xlane.f32.xlu0 %v1477
        %v1509 = vpop.xlane.xlu0 %1508
        %1510 = vadd.xlane.f32.xlu0 %v1479
        %v1511 = vpop.xlane.xlu0 %1510
        %1512 = vadd.xlane.f32.xlu0 %v1481
        %v1513 = vpop.xlane.xlu0 %1512
        %v1514 = vrcp.pop %v1483
        %v1515 = vmul.f32 %v1483, %v1514
        %v1516 = vsub.f32 1.0, %v1515
        %v1517 = vmul.f32 %v1514, %v1516
        %v1518 = vadd.f32 %v1514, %v1517
        %vm1519 = vweird.f32 %v1483
        %vm1520 = vweird.f32 %v1514
        %vm1521 = vmor %vm1519, %vm1520
        %v1522 = vsel %vm1521, %v1514, %v1518
        %v1523 = vand.u32 2147483647, %v1483
        %vm1524 = vcmp.eq.f32.partialorder %v1523, 8.507059e+37
        %v1525 = vand.u32 %v1483, 2147483648
        %v1526 = vor.u32 1.1754944e-38, %v1525
        %v1527 = vsel %vm1524, %v1526, %v1522
        %v1528 = vmul.f32 %v1451, %v1527
        %v1529 = vrcp.pop %v1485
        %v1530 = vmul.f32 %v1485, %v1529
        %v1531 = vsub.f32 1.0, %v1530
        %v1532 = vmul.f32 %v1529, %v1531
        %v1533 = vadd.f32 %v1529, %v1532
        %vm1534 = vweird.f32 %v1485
        %vm1535 = vweird.f32 %v1529
        %vm1536 = vmor %vm1534, %vm1535
        %v1537 = vsel %vm1536, %v1529, %v1533
        %v1538 = vand.u32 2147483647, %v1485
        %vm1539 = vcmp.eq.f32.partialorder %v1538, 8.507059e+37
        %v1540 = vand.u32 %v1485, 2147483648
        %v1541 = vor.u32 1.1754944e-38, %v1540
        %v1542 = vsel %vm1539, %v1541, %v1537
        %v1543 = vmul.f32 %v1453, %v1542
        %v1544 = vrcp.pop %v1487
        %v1545 = vmul.f32 %v1487, %v1544
        %v1546 = vsub.f32 1.0, %v1545
        %v1547 = vmul.f32 %v1544, %v1546
        %v1548 = vadd.f32 %v1544, %v1547
        %vm1549 = vweird.f32 %v1487
        %vm1550 = vweird.f32 %v1544
        %vm1551 = vmor %vm1549, %vm1550
        %v1552 = vsel %vm1551, %v1544, %v1548
        %v1553 = vand.u32 2147483647, %v1487
        %vm1554 = vcmp.eq.f32.partialorder %v1553, 8.507059e+37
        %v1555 = vand.u32 %v1487, 2147483648
        %v1556 = vor.u32 1.1754944e-38, %v1555
        %v1557 = vsel %vm1554, %v1556, %v1552
        %v1558 = vmul.f32 %v1455, %v1557
        %v1559 = vrcp.pop %v1489
        %v1560 = vmul.f32 %v1489, %v1559
        %v1561 = vsub.f32 1.0, %v1560
        %v1562 = vmul.f32 %v1559, %v1561
        %v1563 = vadd.f32 %v1559, %v1562
        %vm1564 = vweird.f32 %v1489
        %vm1565 = vweird.f32 %v1559
        %vm1566 = vmor %vm1564, %vm1565
        %v1567 = vsel %vm1566, %v1559, %v1563
        %v1568 = vand.u32 2147483647, %v1489
        %vm1569 = vcmp.eq.f32.partialorder %v1568, 8.507059e+37
        %v1570 = vand.u32 %v1489, 2147483648
        %v1571 = vor.u32 1.1754944e-38, %v1570
        %v1572 = vsel %vm1569, %v1571, %v1567
        %v1573 = vmul.f32 %v1457, %v1572
        %v1574 = vrcp.pop %v1491
        %v1575 = vmul.f32 %v1491, %v1574
        %v1576 = vsub.f32 1.0, %v1575
        %v1577 = vmul.f32 %v1574, %v1576
        %v1578 = vadd.f32 %v1574, %v1577
        %vm1579 = vweird.f32 %v1491
        %vm1580 = vweird.f32 %v1574
        %vm1581 = vmor %vm1579, %vm1580
        %v1582 = vsel %vm1581, %v1574, %v1578
        %v1583 = vand.u32 2147483647, %v1491
        %vm1584 = vcmp.eq.f32.partialorder %v1583, 8.507059e+37
        %v1585 = vand.u32 %v1491, 2147483648
        %v1586 = vor.u32 1.1754944e-38, %v1585
        %v1587 = vsel %vm1584, %v1586, %v1582
        %v1588 = vmul.f32 %v1459, %v1587
        %v1589 = vrcp.pop %v1493
        %v1590 = vmul.f32 %v1493, %v1589
        %v1591 = vsub.f32 1.0, %v1590
        %v1592 = vmul.f32 %v1589, %v1591
        %v1593 = vadd.f32 %v1589, %v1592
        %vm1594 = vweird.f32 %v1493
        %vm1595 = vweird.f32 %v1589
        %vm1596 = vmor %vm1594, %vm1595
        %v1597 = vsel %vm1596, %v1589, %v1593
        %v1598 = vand.u32 2147483647, %v1493
        %vm1599 = vcmp.eq.f32.partialorder %v1598, 8.507059e+37
        %v1600 = vand.u32 %v1493, 2147483648
        %v1601 = vor.u32 1.1754944e-38, %v1600
        %v1602 = vsel %vm1599, %v1601, %v1597
        %v1603 = vmul.f32 %v1461, %v1602
        %v1604 = vrcp.pop %v1495
        %v1605 = vmul.f32 %v1495, %v1604
        %v1606 = vsub.f32 1.0, %v1605
        %v1607 = vmul.f32 %v1604, %v1606
        %v1608 = vadd.f32 %v1604, %v1607
        %vm1609 = vweird.f32 %v1495
        %vm1610 = vweird.f32 %v1604
        %vm1611 = vmor %vm1609, %vm1610
        %v1612 = vsel %vm1611, %v1604, %v1608
        %v1613 = vand.u32 2147483647, %v1495
        %vm1614 = vcmp.eq.f32.partialorder %v1613, 8.507059e+37
        %v1615 = vand.u32 %v1495, 2147483648
        %v1616 = vor.u32 1.1754944e-38, %v1615
        %v1617 = vsel %vm1614, %v1616, %v1612
        %v1618 = vmul.f32 %v1463, %v1617
        %v1619 = vrcp.pop %v1497
        %v1620 = vmul.f32 %v1497, %v1619
        %v1621 = vsub.f32 1.0, %v1620
        %v1622 = vmul.f32 %v1619, %v1621
        %v1623 = vadd.f32 %v1619, %v1622
        %vm1624 = vweird.f32 %v1497
        %vm1625 = vweird.f32 %v1619
        %vm1626 = vmor %vm1624, %vm1625
        %v1627 = vsel %vm1626, %v1619, %v1623
        %v1628 = vand.u32 2147483647, %v1497
        %vm1629 = vcmp.eq.f32.partialorder %v1628, 8.507059e+37
        %v1630 = vand.u32 %v1497, 2147483648
        %v1631 = vor.u32 1.1754944e-38, %v1630
        %v1632 = vsel %vm1629, %v1631, %v1627
        %v1633 = vmul.f32 %v1465, %v1632
        %v1634 = vrcp.pop %v1499
        %v1635 = vmul.f32 %v1499, %v1634
        %v1636 = vsub.f32 1.0, %v1635
        %v1637 = vmul.f32 %v1634, %v1636
        %v1638 = vadd.f32 %v1634, %v1637
        %vm1639 = vweird.f32 %v1499
        %vm1640 = vweird.f32 %v1634
        %vm1641 = vmor %vm1639, %vm1640
        %v1642 = vsel %vm1641, %v1634, %v1638
        %v1643 = vand.u32 2147483647, %v1499
        %vm1644 = vcmp.eq.f32.partialorder %v1643, 8.507059e+37
        %v1645 = vand.u32 %v1499, 2147483648
        %v1646 = vor.u32 1.1754944e-38, %v1645
        %v1647 = vsel %vm1644, %v1646, %v1642
        %v1648 = vmul.f32 %v1467, %v1647
        %v1649 = vrcp.pop %v1501
        %v1650 = vmul.f32 %v1501, %v1649
        %v1651 = vsub.f32 1.0, %v1650
        %v1652 = vmul.f32 %v1649, %v1651
        %v1653 = vadd.f32 %v1649, %v1652
        %vm1654 = vweird.f32 %v1501
        %vm1655 = vweird.f32 %v1649
        %vm1656 = vmor %vm1654, %vm1655
        %v1657 = vsel %vm1656, %v1649, %v1653
        %v1658 = vand.u32 2147483647, %v1501
        %vm1659 = vcmp.eq.f32.partialorder %v1658, 8.507059e+37
        %v1660 = vand.u32 %v1501, 2147483648
        %v1661 = vor.u32 1.1754944e-38, %v1660
        %v1662 = vsel %vm1659, %v1661, %v1657
        %v1663 = vmul.f32 %v1469, %v1662
        %v1664 = vrcp.pop %v1503
        %v1665 = vmul.f32 %v1503, %v1664
        %v1666 = vsub.f32 1.0, %v1665
        %v1667 = vmul.f32 %v1664, %v1666
        %v1668 = vadd.f32 %v1664, %v1667
        %vm1669 = vweird.f32 %v1503
        %vm1670 = vweird.f32 %v1664
        %vm1671 = vmor %vm1669, %vm1670
        %v1672 = vsel %vm1671, %v1664, %v1668
        %v1673 = vand.u32 2147483647, %v1503
        %vm1674 = vcmp.eq.f32.partialorder %v1673, 8.507059e+37
        %v1675 = vand.u32 %v1503, 2147483648
        %v1676 = vor.u32 1.1754944e-38, %v1675
        %v1677 = vsel %vm1674, %v1676, %v1672
        %v1678 = vmul.f32 %v1471, %v1677
        %v1679 = vrcp.pop %v1505
        %v1680 = vmul.f32 %v1505, %v1679
        %v1681 = vsub.f32 1.0, %v1680
        %v1682 = vmul.f32 %v1679, %v1681
        %v1683 = vadd.f32 %v1679, %v1682
        %vm1684 = vweird.f32 %v1505
        %vm1685 = vweird.f32 %v1679
        %vm1686 = vmor %vm1684, %vm1685
        %v1687 = vsel %vm1686, %v1679, %v1683
        %v1688 = vand.u32 2147483647, %v1505
        %vm1689 = vcmp.eq.f32.partialorder %v1688, 8.507059e+37
        %v1690 = vand.u32 %v1505, 2147483648
        %v1691 = vor.u32 1.1754944e-38, %v1690
        %v1692 = vsel %vm1689, %v1691, %v1687
        %v1693 = vmul.f32 %v1473, %v1692
        %v1694 = vrcp.pop %v1507
        %v1695 = vmul.f32 %v1507, %v1694
        %v1696 = vsub.f32 1.0, %v1695
        %v1697 = vmul.f32 %v1694, %v1696
        %v1698 = vadd.f32 %v1694, %v1697
        %vm1699 = vweird.f32 %v1507
        %vm1700 = vweird.f32 %v1694
        %vm1701 = vmor %vm1699, %vm1700
        %v1702 = vsel %vm1701, %v1694, %v1698
        %v1703 = vand.u32 2147483647, %v1507
        %vm1704 = vcmp.eq.f32.partialorder %v1703, 8.507059e+37
        %v1705 = vand.u32 %v1507, 2147483648
        %v1706 = vor.u32 1.1754944e-38, %v1705
        %v1707 = vsel %vm1704, %v1706, %v1702
        %v1708 = vmul.f32 %v1475, %v1707
        %v1709 = vrcp.pop %v1509
        %v1710 = vmul.f32 %v1509, %v1709
        %v1711 = vsub.f32 1.0, %v1710
        %v1712 = vmul.f32 %v1709, %v1711
        %v1713 = vadd.f32 %v1709, %v1712
        %vm1714 = vweird.f32 %v1509
        %vm1715 = vweird.f32 %v1709
        %vm1716 = vmor %vm1714, %vm1715
        %v1717 = vsel %vm1716, %v1709, %v1713
        %v1718 = vand.u32 2147483647, %v1509
        %vm1719 = vcmp.eq.f32.partialorder %v1718, 8.507059e+37
        %v1720 = vand.u32 %v1509, 2147483648
        %v1721 = vor.u32 1.1754944e-38, %v1720
        %v1722 = vsel %vm1719, %v1721, %v1717
        %v1723 = vmul.f32 %v1477, %v1722
        %v1724 = vrcp.pop %v1511
        %v1725 = vmul.f32 %v1511, %v1724
        %v1726 = vsub.f32 1.0, %v1725
        %v1727 = vmul.f32 %v1724, %v1726
        %v1728 = vadd.f32 %v1724, %v1727
        %vm1729 = vweird.f32 %v1511
        %vm1730 = vweird.f32 %v1724
        %vm1731 = vmor %vm1729, %vm1730
        %v1732 = vsel %vm1731, %v1724, %v1728
        %v1733 = vand.u32 2147483647, %v1511
        %vm1734 = vcmp.eq.f32.partialorder %v1733, 8.507059e+37
        %v1735 = vand.u32 %v1511, 2147483648
        %v1736 = vor.u32 1.1754944e-38, %v1735
        %v1737 = vsel %vm1734, %v1736, %v1732
        %v1738 = vmul.f32 %v1479, %v1737
        %v1739 = vrcp.pop %v1513
        %v1740 = vmul.f32 %v1513, %v1739
        %v1741 = vsub.f32 1.0, %v1740
        %v1742 = vmul.f32 %v1739, %v1741
        %v1743 = vadd.f32 %v1739, %v1742
        %vm1744 = vweird.f32 %v1513
        %vm1745 = vweird.f32 %v1739
        %vm1746 = vmor %vm1744, %vm1745
        %v1747 = vsel %vm1746, %v1739, %v1743
        %v1748 = vand.u32 2147483647, %v1513
        %vm1749 = vcmp.eq.f32.partialorder %v1748, 8.507059e+37
        %v1750 = vand.u32 %v1513, 2147483648
        %v1751 = vor.u32 1.1754944e-38, %v1750
        %v1752 = vsel %vm1749, %v1751, %v1747
        %v1753 = vmul.f32 %v1481, %v1752
        %1770 = vrot.lane.b32.xlu0 %v504, 96
        %v1771 = vpop.permute.xlu0 %1770
        %1772 = vrot.lane.b32.xlu0 %v507, 96
        %v1773 = vpop.permute.xlu0 %1772
        %1774 = vrot.lane.b32.xlu0 %v510, 96
        %v1775 = vpop.permute.xlu0 %1774
        %1776 = vrot.lane.b32.xlu0 %v513, 96
        %v1777 = vpop.permute.xlu0 %1776
        %1778 = vrot.lane.b32.xlu0 %v516, 96
        %v1779 = vpop.permute.xlu0 %1778
        %1780 = vrot.lane.b32.xlu0 %v519, 96
        %v1781 = vpop.permute.xlu0 %1780
        %1782 = vrot.lane.b32.xlu0 %v522, 96
        %v1783 = vpop.permute.xlu0 %1782
        %1784 = vrot.lane.b32.xlu0 %v525, 96
        %v1785 = vpop.permute.xlu0 %1784
        %1786 = vrot.lane.b32.xlu0 %v528, 96
        %v1787 = vpop.permute.xlu0 %1786
        %1788 = vrot.lane.b32.xlu0 %v531, 96
        %v1789 = vpop.permute.xlu0 %1788
        %1790 = vrot.lane.b32.xlu0 %v534, 96
        %v1791 = vpop.permute.xlu0 %1790
        %1792 = vrot.lane.b32.xlu0 %v537, 96
        %v1793 = vpop.permute.xlu0 %1792
        %1794 = vrot.lane.b32.xlu0 %v540, 96
        %v1795 = vpop.permute.xlu0 %1794
        %1796 = vrot.lane.b32.xlu0 %v543, 96
        %v1797 = vpop.permute.xlu0 %1796
        %1798 = vrot.lane.b32.xlu0 %v546, 96
        %v1799 = vpop.permute.xlu0 %1798
        %1800 = vrot.lane.b32.xlu0 %v549, 96
        %v1801 = vpop.permute.xlu0 %1800
        %1818 = vmatpush.msra.mxu0 %v1801
        %1819 = vmatpush.msra.mxu0 %v1799
        %1820 = vmatpush.msra.mxu0 %v1797
        %1821 = vmatpush.msra.mxu0 %v1795
        %1822 = vmatpush.msra.mxu0 %v1793
        %1823 = vmatpush.msra.mxu0 %v1791
        %1824 = vmatpush.msra.mxu0 %v1789
        %1825 = vmatpush.msra.mxu0 %v1787
        %1826 = vmatpush.msra.mxu0 %v1785
        %1827 = vmatpush.msra.mxu0 %v1783
        %1828 = vmatpush.msra.mxu0 %v1781
        %1829 = vmatpush.msra.mxu0 %v1779
        %1830 = vmatpush.msra.mxu0 %v1777
        %1831 = vmatpush.msra.mxu0 %v1775
        %1832 = vmatpush.msra.mxu0 %v1773
        %1833 = vmatpush.msra.mxu0 %v1771
        %1834 = vmatmul.f32.gmra.mxu0 %v1528
        %v1835 = vpop.f32.mrf.mxu0
        %v1836 = vadd.f32 0.0, %v1835
        %1837 = vmatmul.f32.gmra.mxu0 %v1543
        %v1838 = vpop.f32.mrf.mxu0
        %v1839 = vadd.f32 0.0, %v1838
        %1840 = vmatmul.f32.gmra.mxu0 %v1558
        %v1841 = vpop.f32.mrf.mxu0
        %v1842 = vadd.f32 0.0, %v1841
        %1843 = vmatmul.f32.gmra.mxu0 %v1573
        %v1844 = vpop.f32.mrf.mxu0
        %v1845 = vadd.f32 0.0, %v1844
        %1846 = vmatmul.f32.gmra.mxu0 %v1588
        %v1847 = vpop.f32.mrf.mxu0
        %v1848 = vadd.f32 0.0, %v1847
        %1849 = vmatmul.f32.gmra.mxu0 %v1603
        %v1850 = vpop.f32.mrf.mxu0
        %v1851 = vadd.f32 0.0, %v1850
        %1852 = vmatmul.f32.gmra.mxu0 %v1618
        %v1853 = vpop.f32.mrf.mxu0
        %v1854 = vadd.f32 0.0, %v1853
        %1855 = vmatmul.f32.gmra.mxu0 %v1633
        %v1856 = vpop.f32.mrf.mxu0
        %v1857 = vadd.f32 0.0, %v1856
        %1858 = vmatmul.f32.gmra.mxu0 %v1648
        %v1859 = vpop.f32.mrf.mxu0
        %v1860 = vadd.f32 0.0, %v1859
        %1861 = vmatmul.f32.gmra.mxu0 %v1663
        %v1862 = vpop.f32.mrf.mxu0
        %v1863 = vadd.f32 0.0, %v1862
        %1864 = vmatmul.f32.gmra.mxu0 %v1678
        %v1865 = vpop.f32.mrf.mxu0
        %v1866 = vadd.f32 0.0, %v1865
        %1867 = vmatmul.f32.gmra.mxu0 %v1693
        %v1868 = vpop.f32.mrf.mxu0
        %v1869 = vadd.f32 0.0, %v1868
        %1870 = vmatmul.f32.gmra.mxu0 %v1708
        %v1871 = vpop.f32.mrf.mxu0
        %v1872 = vadd.f32 0.0, %v1871
        %1873 = vmatmul.f32.gmra.mxu0 %v1723
        %v1874 = vpop.f32.mrf.mxu0
        %v1875 = vadd.f32 0.0, %v1874
        %1876 = vmatmul.f32.gmra.mxu0 %v1738
        %v1877 = vpop.f32.mrf.mxu0
        %v1878 = vadd.f32 0.0, %v1877
        %1879 = vmatmul.f32.gmra.mxu0 %v1753
        %v1880 = vpop.f32.mrf.mxu0
        %v1881 = vadd.f32 0.0, %v1880
        %1882 = vdwg.mxu0
        %1891 = vrot.lane.b32.xlu0 %v1133, 32
        %v1892 = vpop.permute.xlu0 %1891
        %1893 = vrot.lane.b32.xlu0 %v1139, 32
        %v1894 = vpop.permute.xlu0 %1893
        %1895 = vrot.lane.b32.xlu0 %v1145, 32
        %v1896 = vpop.permute.xlu0 %1895
        %1897 = vrot.lane.b32.xlu0 %v1151, 32
        %v1898 = vpop.permute.xlu0 %1897
        %1899 = vrot.lane.b32.xlu0 %v1157, 32
        %v1900 = vpop.permute.xlu0 %1899
        %1901 = vrot.lane.b32.xlu0 %v1163, 32
        %v1902 = vpop.permute.xlu0 %1901
        %1903 = vrot.lane.b32.xlu0 %v1169, 32
        %v1904 = vpop.permute.xlu0 %1903
        %1905 = vrot.lane.b32.xlu0 %v1175, 32
        %v1906 = vpop.permute.xlu0 %1905
        %1923 = vrot.lane.b32.xlu0 %v1836, 64
        %v1924 = vpop.permute.xlu0 %1923
        %1925 = vrot.lane.b32.xlu0 %v1842, 64
        %v1926 = vpop.permute.xlu0 %1925
        %1927 = vrot.lane.b32.xlu0 %v1848, 64
        %v1928 = vpop.permute.xlu0 %1927
        %1929 = vrot.lane.b32.xlu0 %v1854, 64
        %v1930 = vpop.permute.xlu0 %1929
        %1931 = vrot.lane.b32.xlu0 %v1860, 64
        %v1932 = vpop.permute.xlu0 %1931
        %1933 = vrot.lane.b32.xlu0 %v1866, 64
        %v1934 = vpop.permute.xlu0 %1933
        %1935 = vrot.lane.b32.xlu0 %v1872, 64
        %v1936 = vpop.permute.xlu0 %1935
        %1937 = vrot.lane.b32.xlu0 %v1878, 64
        %v1938 = vpop.permute.xlu0 %1937
        %1955 = vrot.lane.b32.xlu0 %v1839, 96
        %v1956 = vpop.permute.xlu0 %1955
        %1957 = vrot.lane.b32.xlu0 %v1845, 96
        %v1958 = vpop.permute.xlu0 %1957
        %1959 = vrot.lane.b32.xlu0 %v1851, 96
        %v1960 = vpop.permute.xlu0 %1959
        %1961 = vrot.lane.b32.xlu0 %v1857, 96
        %v1962 = vpop.permute.xlu0 %1961
        %1963 = vrot.lane.b32.xlu0 %v1863, 96
        %v1964 = vpop.permute.xlu0 %1963
        %1965 = vrot.lane.b32.xlu0 %v1869, 96
        %v1966 = vpop.permute.xlu0 %1965
        %1967 = vrot.lane.b32.xlu0 %v1875, 96
        %v1968 = vpop.permute.xlu0 %1967
        %1969 = vrot.lane.b32.xlu0 %v1881, 96
        %v1970 = vpop.permute.xlu0 %1969
        %v1979 = vsel %vm372, %v1130, %v1892
        %v1980 = vsel %vm372, %v1136, %v1894
        %v1981 = vsel %vm372, %v1142, %v1896
        %v1982 = vsel %vm372, %v1148, %v1898
        %v1983 = vsel %vm372, %v1154, %v1900
        %v1984 = vsel %vm372, %v1160, %v1902
        %v1985 = vsel %vm372, %v1166, %v1904
        %v1986 = vsel %vm372, %v1172, %v1906
        %vm1987 = vcmask 523264
        %v1988 = vsel %vm1987, %v1979, %v1924
        %v1989 = vsel %vm1987, %v1980, %v1926
        %v1990 = vsel %vm1987, %v1981, %v1928
        %v1991 = vsel %vm1987, %v1982, %v1930
        %v1992 = vsel %vm1987, %v1983, %v1932
        %v1993 = vsel %vm1987, %v1984, %v1934
        %v1994 = vsel %vm1987, %v1985, %v1936
        %v1995 = vsel %vm1987, %v1986, %v1938
        %vm1996 = vcmask 785408
        %v1997 = vsel %vm1996, %v1988, %v1956
        %v1998 = vsel %vm1996, %v1989, %v1958
        %v1999 = vsel %vm1996, %v1990, %v1960
        %v2000 = vsel %vm1996, %v1991, %v1962
        %v2001 = vsel %vm1996, %v1992, %v1964
        %v2002 = vsel %vm1996, %v1993, %v1966
        %v2003 = vsel %vm1996, %v1994, %v1968
        %v2004 = vsel %vm1996, %v1995, %v1970
        %v2005 = vld [vmem:[#allocation6] sm:$0xff]
        %v2006 = vld [vmem:[#allocation6 + $0x8] sm:$0xff]
        %v2007 = vld [vmem:[#allocation6 + $0x10] sm:$0xff]
        %v2008 = vld [vmem:[#allocation6 + $0x18] sm:$0xff]
        %v2009 = vld [vmem:[#allocation6 + $0x20] sm:$0xff]
        %v2010 = vld [vmem:[#allocation6 + $0x28] sm:$0xff]
        %v2011 = vld [vmem:[#allocation6 + $0x30] sm:$0xff]
        %v2012 = vld [vmem:[#allocation6 + $0x38] sm:$0xff]
        %v2013 = vld [vmem:[#allocation6 + $0x40] sm:$0xff]
        %v2014 = vld [vmem:[#allocation6 + $0x48] sm:$0xff]
        %v2015 = vld [vmem:[#allocation6 + $0x50] sm:$0xff]
        %v2016 = vld [vmem:[#allocation6 + $0x58] sm:$0xff]
        %v2017 = vld [vmem:[#allocation6 + $0x60] sm:$0xff]
        %v2018 = vld [vmem:[#allocation6 + $0x68] sm:$0xff]
        %v2019 = vld [vmem:[#allocation6 + $0x70] sm:$0xff]
        %v2020 = vld [vmem:[#allocation6 + $0x78] sm:$0xff]
        %v2021 = vld [vmem:[%s4] sm:$0x1]
        %v2023 = vperm.slane %v2021, 0
        %2025 = vmatpush.msra.mxu0 %v2020
        %2026 = vmatpush.msra.mxu0 %v2019
        %2027 = vmatpush.msra.mxu0 %v2018
        %2028 = vmatpush.msra.mxu0 %v2017
        %2029 = vmatpush.msra.mxu0 %v2016
        %2030 = vmatpush.msra.mxu0 %v2015
        %2031 = vmatpush.msra.mxu0 %v2014
        %2032 = vmatpush.msra.mxu0 %v2013
        %2033 = vmatpush.msra.mxu0 %v2012
        %2034 = vmatpush.msra.mxu0 %v2011
        %2035 = vmatpush.msra.mxu0 %v2010
        %2036 = vmatpush.msra.mxu0 %v2009
        %2037 = vmatpush.msra.mxu0 %v2008
        %2038 = vmatpush.msra.mxu0 %v2007
        %2039 = vmatpush.msra.mxu0 %v2006
        %2040 = vmatpush.msra.mxu0 %v2005
        %2041 = vmatmul.f32.gmra.mxu0 %v1997
        %v2042 = vpop.f32.mrf.mxu0
        %v2043 = vadd.f32 %v2023, %v2042
        %2044 = vmatmul.f32.gmra.mxu0 %v1998
        %v2045 = vpop.f32.mrf.mxu0
        %v2046 = vadd.f32 %v2023, %v2045
        %2047 = vmatmul.f32.gmra.mxu0 %v1999
        %v2048 = vpop.f32.mrf.mxu0
        %v2049 = vadd.f32 %v2023, %v2048
        %2050 = vmatmul.f32.gmra.mxu0 %v2000
        %v2051 = vpop.f32.mrf.mxu0
        %v2052 = vadd.f32 %v2023, %v2051
        %2053 = vmatmul.f32.gmra.mxu0 %v2001
        %v2054 = vpop.f32.mrf.mxu0
        %v2055 = vadd.f32 %v2023, %v2054
        %2056 = vmatmul.f32.gmra.mxu0 %v2002
        %v2057 = vpop.f32.mrf.mxu0
        %v2058 = vadd.f32 %v2023, %v2057
        %2059 = vmatmul.f32.gmra.mxu0 %v2003
        %v2060 = vpop.f32.mrf.mxu0
        %v2061 = vadd.f32 %v2023, %v2060
        %2062 = vmatmul.f32.gmra.mxu0 %v2004
        %v2063 = vpop.f32.mrf.mxu0
        %v2064 = vadd.f32 %v2023, %v2063
        %2065 = vdwg.mxu0
        %v2066 = vadd.f32 %v2043, %v1997
        %v2067 = vadd.f32 %v2046, %v1998
        %v2068 = vadd.f32 %v2049, %v1999
        %v2069 = vadd.f32 %v2052, %v2000
        %v2070 = vadd.f32 %v2055, %v2001
        %v2071 = vadd.f32 %v2058, %v2002
        %v2072 = vadd.f32 %v2061, %v2003
        %v2073 = vadd.f32 %v2064, %v2004
        %2074 = vst [vmem:[%s324] sm:$0xff] %v2066
        %2075 = vst [vmem:[%s324 + $0x8] sm:$0xff] %v2067
        %2076 = vst [vmem:[%s324 + $0x10] sm:$0xff] %v2068
        %2077 = vst [vmem:[%s324 + $0x18] sm:$0xff] %v2069
        %2078 = vst [vmem:[%s324 + $0x20] sm:$0xff] %v2070
        %2079 = vst [vmem:[%s324 + $0x28] sm:$0xff] %v2071
        %2080 = vst [vmem:[%s324 + $0x30] sm:$0xff] %v2072
        %2081 = vst [vmem:[%s324 + $0x38] sm:$0xff] %v2073
        %s2082 = smul.u32 8, %s22
        %p2083 = scmp.lt.s32.totalorder %s2082, 15
        %s2084 = scalar_select %p2083, %s2082, 15
        %s2085 = smul.addr %s2084, 8
        %s2086 = scalar_lea.vmem %s6, %s2085
        // Predicated region
        $region61: #{_lambda_.1} parent=43 // pred_check
          %p2087 = pneg %p171
        $region62: #{_lambda_.1} parent=43 // pred_check_branch
          %2089 = sbr.rel (%p2087) target = $region64
        $region63: #{_lambda_.1} parent=43 // pred_region
          %s2090 = smul.u32 8, %s22
        $region64: #{_lambda_.1} parent=43 // pred_fallthru
          _
      $region44: #{_lambda_.1} parent=5 // pred_fallthru
        _
      %p2091 = scmp.le.s32.totalorder 2, %s17
      // Predicated region
      $region65: #{_lambda_.1} parent=5 // pred_check
        %p2092 = pneg %p2091
      $region66: #{_lambda_.1} parent=5 // pred_check_branch
        %2094 = sbr.rel (%p2092) target = $region68
      $region67: #{_lambda_.1} parent=5 // pred_region
        %s2095 = ssub.s32 %s17, 2
        // Predicated region
        $region69: #{_lambda_.1} parent=67 // pred_check
          %p2096 = pneg %p177
        $region70: #{_lambda_.1} parent=67 // pred_check_branch
          %2098 = sbr.rel (%p2096) target = $region72
        $region71: #{_lambda_.1} parent=67 // pred_region
          %s2099 = smul.u32 8, %s23
          %p2100 = scmp.lt.s32.totalorder %s2099, 15
          %s2101 = scalar_select %p2100, %s2099, 15
          %s2102 = smul.addr %s2101, 8
          %s2103 = scalar_lea.vmem %s6, %s2102
        $region72: #{_lambda_.1} parent=67 // pred_fallthru
          _
      $region68: #{_lambda_.1} parent=5 // pred_fallthru
        _
    $region6: #{_lambda_.1} parent=1 // loop_footer
      %s21 = sadd.s32 1, %s17
    $region7: #{_lambda_.1} parent=1 // loop_footer_branch
      %16 = sbr.rel target = $region3
    $region8: #{_lambda_.1} parent=1 // loop_exit
      _
    %2104 = vsyncpa [#allocation3], 1
    %s2105 = scalar_lea.sflag [#allocation3], 1
    %2106 = vsyncpa %s2105, 1
    %2107 = vsyncpa [#allocation5], 1
    %2108 = vsyncpa [#allocation8], 1

</llo_original>
